<compile_context>
chip_gen: v7x
topology: tpu7x:2x2x1
jax: 0.10.0
libtpu: 0.0.40
codegen_flags: <defaults>
</compile_context>

<pallas_src>
import functools

import jax
import jax.numpy as jnp
from jax import lax
from jax.experimental import pallas as pl
from jax.experimental.pallas import tpu as pltpu

POOL_SIZES = (1, 2, 3, 6)
BN_EPS = 1e-5

# Row ranges of pools 2/3/6 inside the packed block-diagonal key matrix
# (each level padded to a sublane-aligned row count: 4->8, 9->16, 36->40).
_PACK_ROWS = ((0, 8), (8, 24), (24, 64))
_PACK_TOTAL = 64


def _vmem_limit_bytes():
    cap = 128 * 1024 * 1024
    try:
        cap = int(getattr(pltpu.get_tpu_info(), "vmem_capacity_bytes", cap))
    except Exception:
        pass
    # ~96 MiB on v5e/v6e (128 MiB physical VMEM), ~48 MiB on v7x (64 MiB).
    return int(min(cap * 3 // 4, 96 * 1024 * 1024))


VMEM_LIMIT = _vmem_limit_bytes()


def _pick_tile(hw_padded, batch):
    tile = 128
    for t in (2048, 1024, 512, 256, 128):
        if hw_padded % t == 0:
            tile = t
            break
    # keep >= 2 parallel grid steps so both v7x TensorCores get work
    while batch * (hw_padded // tile) < 2 and tile > 128:
        tile //= 2
    return tile


# ------------------------------------------------------------------ kernels --

def _pam_kernel(x_ref, wq_ref, qs_ref, qb_ref, pk0_ref, pkp_ref, eb_ref, o_ref,
                *, key_dim):
    """Fused 4-level PAM: query conv (folded BN+ReLU) + attention + residual.

    x_ref  : (1, C, T)        bf16  input pixel tile (HW on lanes)
    wq_ref : (4K, C)          bf16  stacked query-conv weights (pools 1/2/3/6)
    qs/qb  : (4K, 1)          f32   folded BN scale / bias
    pk0_ref: (1, K, 1)        f32   pool=1 pooled key (value vector)
    pkp_ref: (1, 64, 3K)      f32   block-diagonal packed keys for pools 2/3/6
    eb_ref : (64, 1)          f32   0 on real key rows, -1e30 on pad rows
    o_ref  : (1, 4K, T)       bf16  attention output + residual, levels stacked
    """
    K = key_dim
    x = x_ref[0]                                                     # (C, T)
    qT = jnp.dot(wq_ref[...], x, preferred_element_type=jnp.float32)
    qT = jnp.maximum(qT * qs_ref[...] + qb_ref[...], 0.0)           # (4K, T) f32

    # pool=1: softmax over a single key is identically 1 -> output is the pooled
    # key broadcast over T; no energy/exp/value matmul needed.
    out0 = qT[:K, :] + pk0_ref[0]                                    # (K, T)

    # pools 2/3/6: one energy matmul + one value matmul via block-diagonal keys;
    # full f32 softmax (exact denominator) for parity with the reference.
    pk = pkp_ref[0]                                                  # (64, 3K)
    q123 = qT[K:, :]                                                 # (3K, T)
    e = jnp.dot(pk, q123, preferred_element_type=jnp.float32) + eb_ref[...]
    parts = []
    for lo, hi in _PACK_ROWS:
        el = e[lo:hi, :]
        m = jnp.max(el, axis=0, keepdims=True)
        ex = jnp.exp(el - m)
        parts.append(ex / jnp.sum(ex, axis=0, keepdims=True))
    attn = jnp.concatenate(parts, axis=0)                            # (64, T) f32
    out123 = lax.dot_general(pk, attn, (((0,), (0,)), ((), ())),
                             preferred_element_type=jnp.float32) + q123
    o_ref[0] = jnp.concatenate([out0, out123], axis=0).astype(o_ref.dtype)


def _conv_head_kernel(x_ref, pam_ref, w3_ref, s3_ref, b3_ref, wo_ref, bo_ref,
                      mask_ref, o_ref, *, W):
    """3x3 conv (padding=1, no bias) + folded BN + ReLU + fused 1x1 classifier.

    The 9 taps are formed in-kernel from lane-shifted views of the (2C, HW)
    slab (no im2col), and the x / PAM halves are concatenated in VMEM.

    x_ref  : (1, C, HW)     bf16
    pam_ref: (1, 4K, HW)    bf16
    w3_ref : (9, Co, 2C)    bf16   3x3 weights, tap-major (dy*3+dx)
    s3/b3  : (Co, 1)        f32    folded BN
    wo_ref : (Cout, Co)     f32    1x1 classifier weight
    bo_ref : (Cout, 1)      f32    classifier bias
    mask_ref:(2, HW)        f32    column-edge masks (dx=0 row, dx=2 row)
    o_ref  : (1, Cout, HW)  f32
    """
    f = jnp.concatenate([x_ref[0], pam_ref[0]], axis=0)              # (2C, HW)
    HW = f.shape[1]
    zpad = jnp.zeros((f.shape[0], W + 1), f.dtype)
    fpad = jnp.concatenate([zpad, f, zpad], axis=1)                  # (2C, HW+2W+2)

    acc = None
    for dy in range(3):
        for dx in range(3):
            off = (dy - 1) * W + (dx - 1)
            s = fpad[:, (W + 1) + off:(W + 1) + off + HW]            # (2C, HW)
            contrib = jnp.dot(w3_ref[dy * 3 + dx], s,
                              preferred_element_type=jnp.float32)    # (Co, HW)
            # vertical edges are zero-filled by fpad's border; horizontal edges
            # wrap in the flat shift, so mask the affected columns.
            if dx == 0:
                contrib = contrib * mask_ref[0:1, :]
            elif dx == 2:
                contrib = contrib * mask_ref[1:2, :]
            acc = contrib if acc is None else acc + contrib

    h = jnp.maximum(acc * s3_ref[...] + b3_ref[...], 0.0)            # (Co, HW)
    # TODO(synk): nn.Dropout2d(0.1, False) treated as inference-mode identity.
    y = jnp.dot(wo_ref[...], h, preferred_element_type=jnp.float32)
    o_ref[0] = (y + bo_ref[...]).astype(o_ref.dtype)


# ------------------------------------------------------------ kernel wrappers --

def pam_pyramid(xT_bf, wq_bf, q_scale, q_bias, pk0, pk_packed, ebias,
                *, key_dim, tile):
    B, C, HWp = xT_bf.shape
    K4 = wq_bf.shape[0]
    K3 = pk_packed.shape[2]
    ce = pl.CostEstimate(
        flops=int(B * HWp * (2 * K4 * C + 4 * _PACK_TOTAL * K3)),
        transcendentals=int(B * _PACK_TOTAL * HWp),
        bytes_accessed=int(B * (C + K4) * HWp * 2 + K4 * C * 2
                           + B * _PACK_TOTAL * K3 * 4),
    )
    return pl.pallas_call(
        functools.partial(_pam_kernel, key_dim=key_dim),
        out_shape=jax.ShapeDtypeStruct((B, K4, HWp), jnp.bfloat16),
        grid=(B, HWp // tile),
        in_specs=[
            pl.BlockSpec((1, C, tile), lambda b, i: (b, 0, i)),
            pl.BlockSpec((K4, C), lambda b, i: (0, 0)),
            pl.BlockSpec((K4, 1), lambda b, i: (0, 0)),
            pl.BlockSpec((K4, 1), lambda b, i: (0, 0)),
            pl.BlockSpec((1, key_dim, 1), lambda b, i: (b, 0, 0)),
            pl.BlockSpec((1, _PACK_TOTAL, K3), lambda b, i: (b, 0, 0)),
            pl.BlockSpec((_PACK_TOTAL, 1), lambda b, i: (0, 0)),
        ],
        out_specs=pl.BlockSpec((1, K4, tile), lambda b, i: (b, 0, i)),
        compiler_params=pltpu.CompilerParams(
            dimension_semantics=("parallel", "parallel"),
            vmem_limit_bytes=VMEM_LIMIT),
        cost_estimate=ce,
    )(xT_bf, wq_bf, q_scale, q_bias, pk0, pk_packed, ebias)


def conv3x3_head(xT_bf, pam_bf, w3_bf, s3, b3, wo, b_out, edge_mask, *, W):
    B, C, HW = xT_bf.shape
    C4K = pam_bf.shape[1]
    C2 = C + C4K
    Co = w3_bf.shape[1]
    Cout = wo.shape[0]
    ce = pl.CostEstimate(
        flops=int(B * (2 * 9 * Co * C2 * HW + 2 * Cout * Co * HW)),
        transcendentals=0,
        bytes_accessed=int(B * (C2 * HW * 2 + Cout * HW * 4) + 9 * Co * C2 * 2),
    )
    return pl.pallas_call(
        functools.partial(_conv_head_kernel, W=W),
        out_shape=jax.ShapeDtypeStruct((B, Cout, HW), jnp.float32),
        grid=(B,),
        in_specs=[
            pl.BlockSpec((1, C, HW), lambda b: (b, 0, 0)),
            pl.BlockSpec((1, C4K, HW), lambda b: (b, 0, 0)),
            pl.BlockSpec((9, Co, C2), lambda b: (0, 0, 0)),
            pl.BlockSpec((Co, 1), lambda b: (0, 0)),
            pl.BlockSpec((Co, 1), lambda b: (0, 0)),
            pl.BlockSpec((Cout, Co), lambda b: (0, 0)),
            pl.BlockSpec((Cout, 1), lambda b: (0, 0)),
            pl.BlockSpec((2, HW), lambda b: (0, 0)),
        ],
        out_specs=pl.BlockSpec((1, Cout, HW), lambda b: (b, 0, 0)),
        compiler_params=pltpu.CompilerParams(
            dimension_semantics=("parallel",),
            vmem_limit_bytes=VMEM_LIMIT),
        cost_estimate=ce,
    )(xT_bf, pam_bf, w3_bf, s3.reshape(Co, 1), b3.reshape(Co, 1),
      wo, b_out.reshape(Cout, 1), edge_mask)


# --------------------------------------------------------------------- glue --

def adaptive_avg_pool_nchw(x, p):
    """PyTorch AdaptiveAvgPool2d semantics, channels-first, returns (B, C, p*p)."""
    B, C, H, W = x.shape
    rows = []
    for i in range(p):
        h0, h1 = (i * H) // p, -((-(i + 1) * H) // p)
        cols = []
        for j in range(p):
            w0, w1 = (j * W) // p, -((-(j + 1) * W) // p)
            cols.append(jnp.mean(x[:, :, h0:h1, w0:w1], axis=(2, 3)))   # (B, C)
        rows.append(jnp.stack(cols, axis=-1))                           # (B, C, p)
    return jnp.stack(rows, axis=-2).reshape(B, C, p * p)


def _key_proj(x, wkT, ks, kb, pool):
    """Key conv on the adaptively pooled map (<= 36 pixels) -- plain XLA glue."""
    pooled = adaptive_avg_pool_nchw(x, pool)                            # (B, C, p^2)
    pk = jnp.einsum('bcp,kc->bpk', pooled, wkT)                         # (B, p^2, K)
    return jnp.maximum(pk * ks[None, None, :] + kb[None, None, :], 0.0)  # f32


def psp2_head(x_nchw, params):
    x = x_nchw.astype(jnp.float32)
    B, C, H, W = x.shape
    HW = H * W
    K = params["wqT"].shape[0] // 4
    xT = x.reshape(B, C, HW)

    # pooled keys per pyramid level (tiny): XLA glue, kept in f32.
    pk_list = [
        _key_proj(x, params["wkT"][l], params["k_scale"][l], params["k_bias"][l], p)
        for l, p in enumerate(POOL_SIZES)
    ]                                                                    # (B, p^2, K)
    pk0 = jnp.transpose(pk_list[0], (0, 2, 1))                           # (B, K, 1)

    # block-diagonal packed keys for pools 2/3/6 + softmax pad-row bias.
    pk_packed = jnp.zeros((B, _PACK_TOTAL, 3 * K), jnp.float32)
    valid = jnp.zeros((_PACK_TOTAL, 1), jnp.float32)
    for i, (p, (ro, _)) in enumerate(zip(POOL_SIZES[1:], _PACK_ROWS)):
        pk_packed = pk_packed.at[:, ro:ro + p * p, i * K:(i + 1) * K].set(pk_list[i + 1])
        valid = valid.at[ro:ro + p * p].set(1.0)
    ebias = (valid - 1.0) * 1e30                                         # 0 / -1e30

    # PAM pyramid: lane-dense pixel tiles, HW padded to a 128 multiple if needed.
    HWp = -(-HW // 128) * 128
    xTp = xT if HWp == HW else jnp.pad(xT, ((0, 0), (0, 0), (0, HWp - HW)))
    tile = _pick_tile(HWp, B)
    pam = pam_pyramid(xTp.astype(jnp.bfloat16),
                      params["wqT"].astype(jnp.bfloat16),
                      params["q_scale"].reshape(-1, 1),
                      params["q_bias"].reshape(-1, 1),
                      pk0, pk_packed, ebias, key_dim=K, tile=tile)       # (B,4K,HWp)
    if HWp != HW:
        pam = pam[:, :, :HW]

    # 3x3 conv + BN + ReLU + 1x1 classifier; taps formed in-kernel, no HBM concat.
    col = jnp.arange(HW, dtype=jnp.int32) % W
    edge_mask = jnp.stack([(col != 0).astype(jnp.float32),
                           (col != W - 1).astype(jnp.float32)], axis=0)  # (2, HW)
    y = conv3x3_head(xT.astype(jnp.bfloat16), pam,
                     params["w3T"].astype(jnp.bfloat16),
                     params["s3"], params["b3"],
                     params["woutT"], params["b_out"], edge_mask, W=W)   # (B,Cout,HW)
    return y.reshape(B, -1, H, W)                                        # NCHW


# -------------------------------------------------------------- parameters --

def fold_bn(conv_bias, gamma, beta, mean, var, eps=BN_EPS):
    s = gamma / jnp.sqrt(var + eps)
    b = (conv_bias - mean) * s + beta
    return s, b


def init_params(key, in_channels, out_channels):
    C = in_channels
    K = C // 4          # PAM key_dim
    inter = C // 4      # inter_channels
    C2 = 2 * C
    keys = iter(jax.random.split(key, 64))

    def nrm(shape, s=0.1):
        return s * jax.random.normal(next(keys), shape, jnp.float32)

    def bn(ch):
        gamma = 1.0 + nrm((ch,))
        beta = nrm((ch,))
        mean = nrm((ch,))
        var = jax.random.uniform(next(keys), (ch,), jnp.float32, 0.5, 1.5)
        return gamma, beta, mean, var

    wq_rows, qs_list, qb_list = [], [], []
    wkT, ks_list, kb_list = [], [], []
    for _pool in POOL_SIZES:
        wq, bq = nrm((K, C)), nrm((K,))          # query conv weight^T (K, C)
        qs, qb = fold_bn(bq, *bn(K))
        wq_rows.append(wq); qs_list.append(qs); qb_list.append(qb)
        wk, bk = nrm((K, C)), nrm((K,))          # key conv weight^T (K, C)
        ksc, kbc = fold_bn(bk, *bn(K))
        wkT.append(wk); ks_list.append(ksc); kb_list.append(kbc)

    w3T = 0.05 * jax.random.normal(next(keys), (9, inter, C2), jnp.float32)
    s3, b3 = fold_bn(jnp.zeros((inter,), jnp.float32), *bn(inter))
    woutT, b_out = nrm((out_channels, inter)), nrm((out_channels,))
    return dict(
        wqT=jnp.concatenate(wq_rows, axis=0),                 # (4K, C)
        q_scale=jnp.concatenate(qs_list),                     # (4K,)
        q_bias=jnp.concatenate(qb_list),                      # (4K,)
        wkT=wkT, k_scale=ks_list, k_bias=kb_list,             # per-pool lists
        w3T=w3T, s3=s3, b3=b3,                                # 3x3 conv + folded BN
        woutT=woutT, b_out=b_out,                             # final 1x1 classifier
    )


# --------------------------------------------------------------------- main --

if __name__ == "__main__":
    key = jax.random.PRNGKey(0)
    kx, kp = jax.random.split(key)

    B, C, H, W = 2, 32, 16, 16          # in_channels=32 (divisible by 4)
    out_channels = 8

    x = jax.random.normal(kx, (B, C, H, W), jnp.float32)   # NCHW, like PyTorch
    params = init_params(kp, C, out_channels)

    y = jax.jit(psp2_head)(x, params)
    y = jax.block_until_ready(y)
    assert y.shape == (B, out_channels, H, W), y.shape
    assert bool(jnp.all(jnp.isfinite(y)))
    print("KERNEL_OK")
</pallas_src>

<mosaic_0001>
module attributes {stable_mosaic.version = 11 : i64} {
  func.func @_conv_head_kernel(%arg0: i32, %arg1: memref<1x32x256xbf16, #tpu.memory_space<vmem>>, %arg2: memref<1x32x256xbf16, #tpu.memory_space<vmem>>, %arg3: memref<9x8x64xbf16, #tpu.memory_space<vmem>>, %arg4: memref<8x1xf32, #tpu.memory_space<vmem>>, %arg5: memref<8x1xf32, #tpu.memory_space<vmem>>, %arg6: memref<8x8xf32, #tpu.memory_space<vmem>>, %arg7: memref<8x1xf32, #tpu.memory_space<vmem>>, %arg8: memref<2x256xf32, #tpu.memory_space<vmem>>, %arg9: memref<1x8x256xf32, #tpu.memory_space<vmem>>) attributes {dimension_semantics = [#tpu.dimension_semantics<parallel>], iteration_bounds = array<i64: 2>, scalar_prefetch = 0 : i64, scratch_operands = 0 : i64, tpu.core_type = #tpu.core_type<tc>, window_params = [{transform_indices = @transform_0, window_bounds = array<i64: 1, 32, 256>}, {transform_indices = @transform_1, window_bounds = array<i64: 1, 32, 256>}, {pipeline_mode = #tpu.pipeline_mode<synchronous>, transform_indices = @transform_2, window_bounds = array<i64: 9, 8, 64>}, {pipeline_mode = #tpu.pipeline_mode<synchronous>, transform_indices = @transform_3, window_bounds = array<i64: 8, 1>}, {pipeline_mode = #tpu.pipeline_mode<synchronous>, transform_indices = @transform_4, window_bounds = array<i64: 8, 1>}, {pipeline_mode = #tpu.pipeline_mode<synchronous>, transform_indices = @transform_5, window_bounds = array<i64: 8, 8>}, {pipeline_mode = #tpu.pipeline_mode<synchronous>, transform_indices = @transform_6, window_bounds = array<i64: 8, 1>}, {pipeline_mode = #tpu.pipeline_mode<synchronous>, transform_indices = @transform_7, window_bounds = array<i64: 2, 256>}, {transform_indices = @transform_8, window_bounds = array<i64: 1, 8, 256>}]} {
    %c0 = arith.constant 0 : index
    %c0_0 = arith.constant 0 : index
    %c0_1 = arith.constant 0 : index
    %0 = vector.load %arg1[%c0, %c0_0, %c0_1] : memref<1x32x256xbf16, #tpu.memory_space<vmem>>, vector<1x32x256xbf16>
    %1 = vector.shape_cast %0 : vector<1x32x256xbf16> to vector<32x256xbf16>
    %c0_2 = arith.constant 0 : index
    %c0_3 = arith.constant 0 : index
    %c0_4 = arith.constant 0 : index
    %2 = vector.load %arg2[%c0_2, %c0_3, %c0_4] : memref<1x32x256xbf16, #tpu.memory_space<vmem>>, vector<1x32x256xbf16>
    %3 = vector.shape_cast %2 : vector<1x32x256xbf16> to vector<32x256xbf16>
    %4 = tpu.concatenate %1, %3 in 0 : vector<32x256xbf16>, vector<32x256xbf16> -> vector<64x256xbf16>
    %cst = arith.constant 0.000000e+00 : bf16
    %5 = vector.broadcast %cst : bf16 to vector<64x17xbf16>
    %6 = tpu.concatenate %5, %4, %5 in 1 : vector<64x17xbf16>, vector<64x256xbf16>, vector<64x17xbf16> -> vector<64x290xbf16>
    %7 = vector.extract_strided_slice %6 {offsets = [0, 0], sizes = [64, 256], strides = [1, 1]} : vector<64x290xbf16> to vector<64x256xbf16>
    %c0_5 = arith.constant 0 : index
    %c0_6 = arith.constant 0 : index
    %c0_7 = arith.constant 0 : index
    %8 = vector.load %arg3[%c0_5, %c0_6, %c0_7] : memref<9x8x64xbf16, #tpu.memory_space<vmem>>, vector<1x8x64xbf16>
    %9 = vector.shape_cast %8 : vector<1x8x64xbf16> to vector<8x64xbf16>
    %cst_8 = arith.constant dense<0.000000e+00> : vector<8x256xf32>
    %10 = tpu.matmul %9, %7, %cst_8 {dimension_numbers = #tpu.dot_dimension_numbers<[1], [0], [0], [1], [0, 0, 1, 1], [], []>} : vector<8x64xbf16>, vector<64x256xbf16>, vector<8x256xf32> -> vector<8x256xf32>
    %c0_9 = arith.constant 0 : index
    %c0_10 = arith.constant 0 : index
    %11 = vector.load %arg8[%c0_9, %c0_10] : memref<2x256xf32, #tpu.memory_space<vmem>>, vector<1x256xf32>
    %12 = vector.broadcast %11 : vector<1x256xf32> to vector<8x256xf32>
    %13 = arith.mulf %10, %12 : vector<8x256xf32>
    %14 = vector.extract_strided_slice %6 {offsets = [0, 1], sizes = [64, 256], strides = [1, 1]} : vector<64x290xbf16> to vector<64x256xbf16>
    %c1 = arith.constant 1 : index
    %c0_11 = arith.constant 0 : index
    %c0_12 = arith.constant 0 : index
    %15 = vector.load %arg3[%c1, %c0_11, %c0_12] : memref<9x8x64xbf16, #tpu.memory_space<vmem>>, vector<1x8x64xbf16>
    %16 = vector.shape_cast %15 : vector<1x8x64xbf16> to vector<8x64xbf16>
    %cst_13 = arith.constant dense<0.000000e+00> : vector<8x256xf32>
    %17 = tpu.matmul %16, %14, %cst_13 {dimension_numbers = #tpu.dot_dimension_numbers<[1], [0], [0], [1], [0, 0, 1, 1], [], []>} : vector<8x64xbf16>, vector<64x256xbf16>, vector<8x256xf32> -> vector<8x256xf32>
    %18 = arith.addf %13, %17 : vector<8x256xf32>
    %19 = vector.extract_strided_slice %6 {offsets = [0, 2], sizes = [64, 256], strides = [1, 1]} : vector<64x290xbf16> to vector<64x256xbf16>
    %c2 = arith.constant 2 : index
    %c0_14 = arith.constant 0 : index
    %c0_15 = arith.constant 0 : index
    %20 = vector.load %arg3[%c2, %c0_14, %c0_15] : memref<9x8x64xbf16, #tpu.memory_space<vmem>>, vector<1x8x64xbf16>
    %21 = vector.shape_cast %20 : vector<1x8x64xbf16> to vector<8x64xbf16>
    %cst_16 = arith.constant dense<0.000000e+00> : vector<8x256xf32>
    %22 = tpu.matmul %21, %19, %cst_16 {dimension_numbers = #tpu.dot_dimension_numbers<[1], [0], [0], [1], [0, 0, 1, 1], [], []>} : vector<8x64xbf16>, vector<64x256xbf16>, vector<8x256xf32> -> vector<8x256xf32>
    %c1_17 = arith.constant 1 : index
    %c0_18 = arith.constant 0 : index
    %23 = vector.load %arg8[%c1_17, %c0_18] : memref<2x256xf32, #tpu.memory_space<vmem>>, vector<1x256xf32>
    %24 = vector.broadcast %23 : vector<1x256xf32> to vector<8x256xf32>
    %25 = arith.mulf %22, %24 : vector<8x256xf32>
    %26 = arith.addf %18, %25 : vector<8x256xf32>
    %27 = vector.extract_strided_slice %6 {offsets = [0, 16], sizes = [64, 256], strides = [1, 1]} : vector<64x290xbf16> to vector<64x256xbf16>
    %c3 = arith.constant 3 : index
    %c0_19 = arith.constant 0 : index
    %c0_20 = arith.constant 0 : index
    %28 = vector.load %arg3[%c3, %c0_19, %c0_20] : memref<9x8x64xbf16, #tpu.memory_space<vmem>>, vector<1x8x64xbf16>
    %29 = vector.shape_cast %28 : vector<1x8x64xbf16> to vector<8x64xbf16>
    %cst_21 = arith.constant dense<0.000000e+00> : vector<8x256xf32>
    %30 = tpu.matmul %29, %27, %cst_21 {dimension_numbers = #tpu.dot_dimension_numbers<[1], [0], [0], [1], [0, 0, 1, 1], [], []>} : vector<8x64xbf16>, vector<64x256xbf16>, vector<8x256xf32> -> vector<8x256xf32>
    %c0_22 = arith.constant 0 : index
    %c0_23 = arith.constant 0 : index
    %31 = vector.load %arg8[%c0_22, %c0_23] : memref<2x256xf32, #tpu.memory_space<vmem>>, vector<1x256xf32>
    %32 = vector.broadcast %31 : vector<1x256xf32> to vector<8x256xf32>
    %33 = arith.mulf %30, %32 : vector<8x256xf32>
    %34 = arith.addf %26, %33 : vector<8x256xf32>
    %35 = vector.extract_strided_slice %6 {offsets = [0, 17], sizes = [64, 256], strides = [1, 1]} : vector<64x290xbf16> to vector<64x256xbf16>
    %c4 = arith.constant 4 : index
    %c0_24 = arith.constant 0 : index
    %c0_25 = arith.constant 0 : index
    %36 = vector.load %arg3[%c4, %c0_24, %c0_25] : memref<9x8x64xbf16, #tpu.memory_space<vmem>>, vector<1x8x64xbf16>
    %37 = vector.shape_cast %36 : vector<1x8x64xbf16> to vector<8x64xbf16>
    %cst_26 = arith.constant dense<0.000000e+00> : vector<8x256xf32>
    %38 = tpu.matmul %37, %35, %cst_26 {dimension_numbers = #tpu.dot_dimension_numbers<[1], [0], [0], [1], [0, 0, 1, 1], [], []>} : vector<8x64xbf16>, vector<64x256xbf16>, vector<8x256xf32> -> vector<8x256xf32>
    %39 = arith.addf %34, %38 : vector<8x256xf32>
    %40 = vector.extract_strided_slice %6 {offsets = [0, 18], sizes = [64, 256], strides = [1, 1]} : vector<64x290xbf16> to vector<64x256xbf16>
    %c5 = arith.constant 5 : index
    %c0_27 = arith.constant 0 : index
    %c0_28 = arith.constant 0 : index
    %41 = vector.load %arg3[%c5, %c0_27, %c0_28] : memref<9x8x64xbf16, #tpu.memory_space<vmem>>, vector<1x8x64xbf16>
    %42 = vector.shape_cast %41 : vector<1x8x64xbf16> to vector<8x64xbf16>
    %cst_29 = arith.constant dense<0.000000e+00> : vector<8x256xf32>
    %43 = tpu.matmul %42, %40, %cst_29 {dimension_numbers = #tpu.dot_dimension_numbers<[1], [0], [0], [1], [0, 0, 1, 1], [], []>} : vector<8x64xbf16>, vector<64x256xbf16>, vector<8x256xf32> -> vector<8x256xf32>
    %c1_30 = arith.constant 1 : index
    %c0_31 = arith.constant 0 : index
    %44 = vector.load %arg8[%c1_30, %c0_31] : memref<2x256xf32, #tpu.memory_space<vmem>>, vector<1x256xf32>
    %45 = vector.broadcast %44 : vector<1x256xf32> to vector<8x256xf32>
    %46 = arith.mulf %43, %45 : vector<8x256xf32>
    %47 = arith.addf %39, %46 : vector<8x256xf32>
    %48 = vector.extract_strided_slice %6 {offsets = [0, 32], sizes = [64, 256], strides = [1, 1]} : vector<64x290xbf16> to vector<64x256xbf16>
    %c6 = arith.constant 6 : index
    %c0_32 = arith.constant 0 : index
    %c0_33 = arith.constant 0 : index
    %49 = vector.load %arg3[%c6, %c0_32, %c0_33] : memref<9x8x64xbf16, #tpu.memory_space<vmem>>, vector<1x8x64xbf16>
    %50 = vector.shape_cast %49 : vector<1x8x64xbf16> to vector<8x64xbf16>
    %cst_34 = arith.constant dense<0.000000e+00> : vector<8x256xf32>
    %51 = tpu.matmul %50, %48, %cst_34 {dimension_numbers = #tpu.dot_dimension_numbers<[1], [0], [0], [1], [0, 0, 1, 1], [], []>} : vector<8x64xbf16>, vector<64x256xbf16>, vector<8x256xf32> -> vector<8x256xf32>
    %c0_35 = arith.constant 0 : index
    %c0_36 = arith.constant 0 : index
    %52 = vector.load %arg8[%c0_35, %c0_36] : memref<2x256xf32, #tpu.memory_space<vmem>>, vector<1x256xf32>
    %53 = vector.broadcast %52 : vector<1x256xf32> to vector<8x256xf32>
    %54 = arith.mulf %51, %53 : vector<8x256xf32>
    %55 = arith.addf %47, %54 : vector<8x256xf32>
    %56 = vector.extract_strided_slice %6 {offsets = [0, 33], sizes = [64, 256], strides = [1, 1]} : vector<64x290xbf16> to vector<64x256xbf16>
    %c7 = arith.constant 7 : index
    %c0_37 = arith.constant 0 : index
    %c0_38 = arith.constant 0 : index
    %57 = vector.load %arg3[%c7, %c0_37, %c0_38] : memref<9x8x64xbf16, #tpu.memory_space<vmem>>, vector<1x8x64xbf16>
    %58 = vector.shape_cast %57 : vector<1x8x64xbf16> to vector<8x64xbf16>
    %cst_39 = arith.constant dense<0.000000e+00> : vector<8x256xf32>
    %59 = tpu.matmul %58, %56, %cst_39 {dimension_numbers = #tpu.dot_dimension_numbers<[1], [0], [0], [1], [0, 0, 1, 1], [], []>} : vector<8x64xbf16>, vector<64x256xbf16>, vector<8x256xf32> -> vector<8x256xf32>
    %60 = arith.addf %55, %59 : vector<8x256xf32>
    %61 = vector.extract_strided_slice %6 {offsets = [0, 34], sizes = [64, 256], strides = [1, 1]} : vector<64x290xbf16> to vector<64x256xbf16>
    %c8 = arith.constant 8 : index
    %c0_40 = arith.constant 0 : index
    %c0_41 = arith.constant 0 : index
    %62 = vector.load %arg3[%c8, %c0_40, %c0_41] : memref<9x8x64xbf16, #tpu.memory_space<vmem>>, vector<1x8x64xbf16>
    %63 = vector.shape_cast %62 : vector<1x8x64xbf16> to vector<8x64xbf16>
    %cst_42 = arith.constant dense<0.000000e+00> : vector<8x256xf32>
    %64 = tpu.matmul %63, %61, %cst_42 {dimension_numbers = #tpu.dot_dimension_numbers<[1], [0], [0], [1], [0, 0, 1, 1], [], []>} : vector<8x64xbf16>, vector<64x256xbf16>, vector<8x256xf32> -> vector<8x256xf32>
    %c1_43 = arith.constant 1 : index
    %c0_44 = arith.constant 0 : index
    %65 = vector.load %arg8[%c1_43, %c0_44] : memref<2x256xf32, #tpu.memory_space<vmem>>, vector<1x256xf32>
    %66 = vector.broadcast %65 : vector<1x256xf32> to vector<8x256xf32>
    %67 = arith.mulf %64, %66 : vector<8x256xf32>
    %68 = arith.addf %60, %67 : vector<8x256xf32>
    %c0_45 = arith.constant 0 : index
    %c0_46 = arith.constant 0 : index
    %69 = vector.load %arg4[%c0_45, %c0_46] : memref<8x1xf32, #tpu.memory_space<vmem>>, vector<8x1xf32>
    %70 = vector.broadcast %69 : vector<8x1xf32> to vector<8x256xf32>
    %71 = arith.mulf %68, %70 : vector<8x256xf32>
    %c0_47 = arith.constant 0 : index
    %c0_48 = arith.constant 0 : index
    %72 = vector.load %arg5[%c0_47, %c0_48] : memref<8x1xf32, #tpu.memory_space<vmem>>, vector<8x1xf32>
    %73 = vector.broadcast %72 : vector<8x1xf32> to vector<8x256xf32>
    %74 = arith.addf %71, %73 : vector<8x256xf32>
    %cst_49 = arith.constant 0.000000e+00 : f32
    %75 = vector.broadcast %cst_49 : f32 to vector<8x256xf32>
    %76 = arith.maximumf %74, %75 : vector<8x256xf32>
    %c0_50 = arith.constant 0 : index
    %c0_51 = arith.constant 0 : index
    %77 = vector.load %arg6[%c0_50, %c0_51] : memref<8x8xf32, #tpu.memory_space<vmem>>, vector<8x8xf32>
    %cst_52 = arith.constant dense<0.000000e+00> : vector<8x256xf32>
    %78 = tpu.matmul %77, %76, %cst_52 {dimension_numbers = #tpu.dot_dimension_numbers<[1], [0], [0], [1], [0, 0, 1, 1], [], []>} : vector<8x8xf32>, vector<8x256xf32>, vector<8x256xf32> -> vector<8x256xf32>
    %c0_53 = arith.constant 0 : index
    %c0_54 = arith.constant 0 : index
    %79 = vector.load %arg7[%c0_53, %c0_54] : memref<8x1xf32, #tpu.memory_space<vmem>>, vector<8x1xf32>
    %80 = vector.broadcast %79 : vector<8x1xf32> to vector<8x256xf32>
    %81 = arith.addf %78, %80 : vector<8x256xf32>
    %c0_55 = arith.constant 0 : index
    %c0_56 = arith.constant 0 : index
    %c0_57 = arith.constant 0 : index
    %82 = vector.load %arg9[%c0_55, %c0_56, %c0_57] : memref<1x8x256xf32, #tpu.memory_space<vmem>>, vector<1x8x256xf32>
    %83 = vector.shape_cast %82 : vector<1x8x256xf32> to vector<8x256xf32>
    %84 = vector.shape_cast %81 : vector<8x256xf32> to vector<1x8x256xf32>
    tpu.vector_store %arg9[%c0_55, %c0_56, %c0_57], %84 {strides = array<i32>} : memref<1x8x256xf32, #tpu.memory_space<vmem>>, vector<1x8x256xf32>,
    return
  }
  func.func @transform_0(%arg0: i32) -> (i32, i32, i32) {
    %c0_i32 = arith.constant 0 : i32
    %c0_i32_0 = arith.constant 0 : i32
    %c0_i32_1 = arith.constant 0 : i32
    return %arg0, %c0_i32, %c0_i32_0 : i32, i32, i32
  }
  func.func @transform_1(%arg0: i32) -> (i32, i32, i32) {
    %c0_i32 = arith.constant 0 : i32
    %c0_i32_0 = arith.constant 0 : i32
    %c0_i32_1 = arith.constant 0 : i32
    return %arg0, %c0_i32, %c0_i32_0 : i32, i32, i32
  }
  func.func @transform_2(%arg0: i32) -> (i32, i32, i32) {
    %c0_i32 = arith.constant 0 : i32
    %c0_i32_0 = arith.constant 0 : i32
    %c0_i32_1 = arith.constant 0 : i32
    %c0_i32_2 = arith.constant 0 : i32
    return %c0_i32, %c0_i32_0, %c0_i32_1 : i32, i32, i32
  }
  func.func @transform_3(%arg0: i32) -> (i32, i32) {
    %c0_i32 = arith.constant 0 : i32
    %c0_i32_0 = arith.constant 0 : i32
    %c0_i32_1 = arith.constant 0 : i32
    return %c0_i32, %c0_i32_0 : i32, i32
  }
  func.func @transform_4(%arg0: i32) -> (i32, i32) {
    %c0_i32 = arith.constant 0 : i32
    %c0_i32_0 = arith.constant 0 : i32
    %c0_i32_1 = arith.constant 0 : i32
    return %c0_i32, %c0_i32_0 : i32, i32
  }
  func.func @transform_5(%arg0: i32) -> (i32, i32) {
    %c0_i32 = arith.constant 0 : i32
    %c0_i32_0 = arith.constant 0 : i32
    %c0_i32_1 = arith.constant 0 : i32
    return %c0_i32, %c0_i32_0 : i32, i32
  }
  func.func @transform_6(%arg0: i32) -> (i32, i32) {
    %c0_i32 = arith.constant 0 : i32
    %c0_i32_0 = arith.constant 0 : i32
    %c0_i32_1 = arith.constant 0 : i32
    return %c0_i32, %c0_i32_0 : i32, i32
  }
  func.func @transform_7(%arg0: i32) -> (i32, i32) {
    %c0_i32 = arith.constant 0 : i32
    %c0_i32_0 = arith.constant 0 : i32
    %c0_i32_1 = arith.constant 0 : i32
    return %c0_i32, %c0_i32_0 : i32, i32
  }
  func.func @transform_8(%arg0: i32) -> (i32, i32, i32) {
    %c0_i32 = arith.constant 0 : i32
    %c0_i32_0 = arith.constant 0 : i32
    %c0_i32_1 = arith.constant 0 : i32
    return %arg0, %c0_i32, %c0_i32_0 : i32, i32, i32
  }
}

module attributes {stable_mosaic.version = 11 : i64} {
  func.func @_pam_kernel(%arg0: i32, %arg1: i32, %arg2: memref<1x32x256xbf16, #tpu.memory_space<vmem>>, %arg3: memref<32x32xbf16, #tpu.memory_space<vmem>>, %arg4: memref<32x1xf32, #tpu.memory_space<vmem>>, %arg5: memref<32x1xf32, #tpu.memory_space<vmem>>, %arg6: memref<1x8x1xf32, #tpu.memory_space<vmem>>, %arg7: memref<1x64x24xf32, #tpu.memory_space<vmem>>, %arg8: memref<64x1xf32, #tpu.memory_space<vmem>>, %arg9: memref<1x32x256xbf16, #tpu.memory_space<vmem>>) attributes {dimension_semantics = [#tpu.dimension_semantics<parallel>, #tpu.dimension_semantics<parallel>], iteration_bounds = array<i64: 2, 1>, scalar_prefetch = 0 : i64, scratch_operands = 0 : i64, tpu.core_type = #tpu.core_type<tc>, window_params = [{transform_indices = @transform_0, window_bounds = array<i64: 1, 32, 256>}, {pipeline_mode = #tpu.pipeline_mode<synchronous>, transform_indices = @transform_1, window_bounds = array<i64: 32, 32>}, {pipeline_mode = #tpu.pipeline_mode<synchronous>, transform_indices = @transform_2, window_bounds = array<i64: 32, 1>}, {pipeline_mode = #tpu.pipeline_mode<synchronous>, transform_indices = @transform_3, window_bounds = array<i64: 32, 1>}, {transform_indices = @transform_4, window_bounds = array<i64: 1, 8, 1>}, {transform_indices = @transform_5, window_bounds = array<i64: 1, 64, 24>}, {pipeline_mode = #tpu.pipeline_mode<synchronous>, transform_indices = @transform_6, window_bounds = array<i64: 64, 1>}, {transform_indices = @transform_7, window_bounds = array<i64: 1, 32, 256>}]} {
    %c0 = arith.constant 0 : index
    %c0_0 = arith.constant 0 : index
    %c0_1 = arith.constant 0 : index
    %0 = vector.load %arg2[%c0, %c0_0, %c0_1] : memref<1x32x256xbf16, #tpu.memory_space<vmem>>, vector<1x32x256xbf16>
    %1 = vector.shape_cast %0 : vector<1x32x256xbf16> to vector<32x256xbf16>
    %c0_2 = arith.constant 0 : index
    %c0_3 = arith.constant 0 : index
    %2 = vector.load %arg3[%c0_2, %c0_3] : memref<32x32xbf16, #tpu.memory_space<vmem>>, vector<32x32xbf16>
    %cst = arith.constant dense<0.000000e+00> : vector<32x256xf32>
    %3 = tpu.matmul %2, %1, %cst {dimension_numbers = #tpu.dot_dimension_numbers<[1], [0], [0], [1], [0, 0, 1, 1], [], []>} : vector<32x32xbf16>, vector<32x256xbf16>, vector<32x256xf32> -> vector<32x256xf32>
    %c0_4 = arith.constant 0 : index
    %c0_5 = arith.constant 0 : index
    %4 = vector.load %arg4[%c0_4, %c0_5] : memref<32x1xf32, #tpu.memory_space<vmem>>, vector<32x1xf32>
    %5 = vector.broadcast %4 : vector<32x1xf32> to vector<32x256xf32>
    %6 = arith.mulf %3, %5 : vector<32x256xf32>
    %c0_6 = arith.constant 0 : index
    %c0_7 = arith.constant 0 : index
    %7 = vector.load %arg5[%c0_6, %c0_7] : memref<32x1xf32, #tpu.memory_space<vmem>>, vector<32x1xf32>
    %8 = vector.broadcast %7 : vector<32x1xf32> to vector<32x256xf32>
    %9 = arith.addf %6, %8 : vector<32x256xf32>
    %cst_8 = arith.constant 0.000000e+00 : f32
    %10 = vector.broadcast %cst_8 : f32 to vector<32x256xf32>
    %11 = arith.maximumf %9, %10 : vector<32x256xf32>
    %12 = vector.extract_strided_slice %11 {offsets = [0, 0], sizes = [8, 256], strides = [1, 1]} : vector<32x256xf32> to vector<8x256xf32>
    %c0_9 = arith.constant 0 : index
    %c0_10 = arith.constant 0 : index
    %c0_11 = arith.constant 0 : index
    %13 = vector.load %arg6[%c0_9, %c0_10, %c0_11] : memref<1x8x1xf32, #tpu.memory_space<vmem>>, vector<1x8x1xf32>
    %14 = vector.shape_cast %13 : vector<1x8x1xf32> to vector<8x1xf32>
    %15 = vector.broadcast %14 : vector<8x1xf32> to vector<8x256xf32>
    %16 = arith.addf %12, %15 : vector<8x256xf32>
    %c0_12 = arith.constant 0 : index
    %c0_13 = arith.constant 0 : index
    %c0_14 = arith.constant 0 : index
    %17 = vector.load %arg7[%c0_12, %c0_13, %c0_14] : memref<1x64x24xf32, #tpu.memory_space<vmem>>, vector<1x64x24xf32>
    %18 = vector.shape_cast %17 : vector<1x64x24xf32> to vector<64x24xf32>
    %19 = vector.extract_strided_slice %11 {offsets = [8, 0], sizes = [24, 256], strides = [1, 1]} : vector<32x256xf32> to vector<24x256xf32>
    %cst_15 = arith.constant dense<0.000000e+00> : vector<64x256xf32>
    %20 = tpu.matmul %18, %19, %cst_15 {dimension_numbers = #tpu.dot_dimension_numbers<[1], [0], [0], [1], [0, 0, 1, 1], [], []>} : vector<64x24xf32>, vector<24x256xf32>, vector<64x256xf32> -> vector<64x256xf32>
    %c0_16 = arith.constant 0 : index
    %c0_17 = arith.constant 0 : index
    %21 = vector.load %arg8[%c0_16, %c0_17] : memref<64x1xf32, #tpu.memory_space<vmem>>, vector<64x1xf32>
    %22 = vector.broadcast %21 : vector<64x1xf32> to vector<64x256xf32>
    %23 = arith.addf %20, %22 : vector<64x256xf32>
    %24 = vector.extract_strided_slice %23 {offsets = [0, 0], sizes = [8, 256], strides = [1, 1]} : vector<64x256xf32> to vector<8x256xf32>
    %cst_18 = arith.constant dense<0xFF800000> : vector<256xf32>
    %25 = vector.multi_reduction <maximumf>, %24, %cst_18 [0] : vector<8x256xf32> to vector<256xf32>
    %26 = vector.shape_cast %25 : vector<256xf32> to vector<1x256xf32>
    %27 = vector.broadcast %26 : vector<1x256xf32> to vector<8x256xf32>
    %28 = arith.subf %24, %27 : vector<8x256xf32>
    %29 = math.exp %28 : vector<8x256xf32>
    %cst_19 = arith.constant dense<0.000000e+00> : vector<256xf32>
    %30 = vector.multi_reduction <add>, %29, %cst_19 [0] : vector<8x256xf32> to vector<256xf32>
    %31 = vector.shape_cast %30 : vector<256xf32> to vector<1x256xf32>
    %32 = vector.broadcast %31 : vector<1x256xf32> to vector<8x256xf32>
    %33 = arith.divf %29, %32 : vector<8x256xf32>
    %34 = vector.extract_strided_slice %23 {offsets = [8, 0], sizes = [16, 256], strides = [1, 1]} : vector<64x256xf32> to vector<16x256xf32>
    %cst_20 = arith.constant dense<0xFF800000> : vector<256xf32>
    %35 = vector.multi_reduction <maximumf>, %34, %cst_20 [0] : vector<16x256xf32> to vector<256xf32>
    %36 = vector.shape_cast %35 : vector<256xf32> to vector<1x256xf32>
    %37 = vector.broadcast %36 : vector<1x256xf32> to vector<16x256xf32>
    %38 = arith.subf %34, %37 : vector<16x256xf32>
    %39 = math.exp %38 : vector<16x256xf32>
    %cst_21 = arith.constant dense<0.000000e+00> : vector<256xf32>
    %40 = vector.multi_reduction <add>, %39, %cst_21 [0] : vector<16x256xf32> to vector<256xf32>
    %41 = vector.shape_cast %40 : vector<256xf32> to vector<1x256xf32>
    %42 = vector.broadcast %41 : vector<1x256xf32> to vector<16x256xf32>
    %43 = arith.divf %39, %42 : vector<16x256xf32>
    %44 = vector.extract_strided_slice %23 {offsets = [24, 0], sizes = [40, 256], strides = [1, 1]} : vector<64x256xf32> to vector<40x256xf32>
    %cst_22 = arith.constant dense<0xFF800000> : vector<256xf32>
    %45 = vector.multi_reduction <maximumf>, %44, %cst_22 [0] : vector<40x256xf32> to vector<256xf32>
    %46 = vector.shape_cast %45 : vector<256xf32> to vector<1x256xf32>
    %47 = vector.broadcast %46 : vector<1x256xf32> to vector<40x256xf32>
    %48 = arith.subf %44, %47 : vector<40x256xf32>
    %49 = math.exp %48 : vector<40x256xf32>
    %cst_23 = arith.constant dense<0.000000e+00> : vector<256xf32>
    %50 = vector.multi_reduction <add>, %49, %cst_23 [0] : vector<40x256xf32> to vector<256xf32>
    %51 = vector.shape_cast %50 : vector<256xf32> to vector<1x256xf32>
    %52 = vector.broadcast %51 : vector<1x256xf32> to vector<40x256xf32>
    %53 = arith.divf %49, %52 : vector<40x256xf32>
    %54 = tpu.concatenate %33, %43, %53 in 0 : vector<8x256xf32>, vector<16x256xf32>, vector<40x256xf32> -> vector<64x256xf32>
    %cst_24 = arith.constant dense<0.000000e+00> : vector<24x256xf32>
    %55 = tpu.matmul %18, %54, %cst_24 {dimension_numbers = #tpu.dot_dimension_numbers<[0], [0], [1], [1], [0, 1, 1, 1], [], []>} : vector<64x24xf32>, vector<64x256xf32>, vector<24x256xf32> -> vector<24x256xf32>
    %56 = arith.addf %55, %19 : vector<24x256xf32>
    %57 = tpu.concatenate %16, %56 in 0 : vector<8x256xf32>, vector<24x256xf32> -> vector<32x256xf32>
    %58 = arith.truncf %57 : vector<32x256xf32> to vector<32x256xbf16>
    %c0_25 = arith.constant 0 : index
    %c0_26 = arith.constant 0 : index
    %c0_27 = arith.constant 0 : index
    %59 = vector.load %arg9[%c0_25, %c0_26, %c0_27] : memref<1x32x256xbf16, #tpu.memory_space<vmem>>, vector<1x32x256xbf16>
    %60 = vector.shape_cast %59 : vector<1x32x256xbf16> to vector<32x256xbf16>
    %61 = vector.shape_cast %58 : vector<32x256xbf16> to vector<1x32x256xbf16>
    tpu.vector_store %arg9[%c0_25, %c0_26, %c0_27], %61 {strides = array<i32>} : memref<1x32x256xbf16, #tpu.memory_space<vmem>>, vector<1x32x256xbf16>,
    return
  }
  func.func @transform_0(%arg0: i32, %arg1: i32) -> (i32, i32, i32) {
    %c0_i32 = arith.constant 0 : i32
    %c0_i32_0 = arith.constant 0 : i32
    return %arg0, %c0_i32, %arg1 : i32, i32, i32
  }
  func.func @transform_1(%arg0: i32, %arg1: i32) -> (i32, i32) {
    %c0_i32 = arith.constant 0 : i32
    %c0_i32_0 = arith.constant 0 : i32
    %c0_i32_1 = arith.constant 0 : i32
    return %c0_i32, %c0_i32_0 : i32, i32
  }
  func.func @transform_2(%arg0: i32, %arg1: i32) -> (i32, i32) {
    %c0_i32 = arith.constant 0 : i32
    %c0_i32_0 = arith.constant 0 : i32
    %c0_i32_1 = arith.constant 0 : i32
    return %c0_i32, %c0_i32_0 : i32, i32
  }
  func.func @transform_3(%arg0: i32, %arg1: i32) -> (i32, i32) {
    %c0_i32 = arith.constant 0 : i32
    %c0_i32_0 = arith.constant 0 : i32
    %c0_i32_1 = arith.constant 0 : i32
    return %c0_i32, %c0_i32_0 : i32, i32
  }
  func.func @transform_4(%arg0: i32, %arg1: i32) -> (i32, i32, i32) {
    %c0_i32 = arith.constant 0 : i32
    %c0_i32_0 = arith.constant 0 : i32
    %c0_i32_1 = arith.constant 0 : i32
    return %arg0, %c0_i32, %c0_i32_0 : i32, i32, i32
  }
  func.func @transform_5(%arg0: i32, %arg1: i32) -> (i32, i32, i32) {
    %c0_i32 = arith.constant 0 : i32
    %c0_i32_0 = arith.constant 0 : i32
    %c0_i32_1 = arith.constant 0 : i32
    return %arg0, %c0_i32, %c0_i32_0 : i32, i32, i32
  }
  func.func @transform_6(%arg0: i32, %arg1: i32) -> (i32, i32) {
    %c0_i32 = arith.constant 0 : i32
    %c0_i32_0 = arith.constant 0 : i32
    %c0_i32_1 = arith.constant 0 : i32
    return %c0_i32, %c0_i32_0 : i32, i32
  }
  func.func @transform_7(%arg0: i32, %arg1: i32) -> (i32, i32, i32) {
    %c0_i32 = arith.constant 0 : i32
    %c0_i32_0 = arith.constant 0 : i32
    return %arg0, %c0_i32, %arg1 : i32, i32, i32
  }
}

</mosaic_0001>

<llo_original>
// kernel: psp2_head.2
$region0: #{psp2_head.2}
  #allocation0 [shape = 'u32[]', space=smem, size = 0x4, offset = 0x4, fixed_abs, tag = 'smem constant byte address 0x4 - core index']
  #allocation1 [shape = 'u32[144,128]{1,0:T(1,128)}', space=vmem, size = 0x12000, scoped, tag = 'internal scratch']
  %s0 = inlined_call_operand.hbm [shape: bf16[2,32,256], index: 0, kind: input, shape index: {}]
  %s1 = inlined_call_operand.hbm [shape: bf16[32,32], index: 1, kind: input, shape index: {}]
  %s2 = inlined_call_operand.hbm [shape: f32[32,1], index: 2, kind: input, shape index: {}]
  %s3 = inlined_call_operand.hbm [shape: f32[32,1], index: 3, kind: input, shape index: {}]
  %s4 = inlined_call_operand.hbm [shape: f32[2,8,1], index: 4, kind: input, shape index: {}]
  %s5 = inlined_call_operand.hbm [shape: f32[2,64,24], index: 5, kind: input, shape index: {}]
  %s6 = inlined_call_operand.hbm [shape: f32[64,1], index: 6, kind: input, shape index: {}]
  %s7 = inlined_call_operand.hbm [shape: bf16[2,32,256], index: 7, kind: output, shape index: {}]
  %s8 = sld [smem:[#allocation0]]
  $region89: #{psp2_head.2} parent=0
    _
  %s10 = ssub.s32 1, %s8
  %s11 = scalar_select 0, %s10, %s8
  $region1: #{psp2_head.2} parent=0
    #allocation2 [shape = 'u8[32768]{0}', space=vmem, size = 0x8000, scoped, tag = 'input window, operand 0']
    #allocation3 [shape = 's32[2]{0}', space=sflag, size = 0x8, scoped, tag = 'scoped memory for psp2_head.2']
    #allocation4 [shape = 's32[2]{0}', space=sflag, size = 0x8, scoped, tag = 'scoped memory for psp2_head.2']
    #allocation5 [shape = 'u8[8192]{0}', space=vmem, size = 0x2000, scoped, tag = 'input window, operand 1, single buffered']
    #allocation6 [shape = 's32[1]{0}', space=sflag, size = 0x4, scoped, tag = 'scoped memory for psp2_head.2']
    #allocation7 [shape = 'u8[16384]{0}', space=vmem, size = 0x4000, scoped, tag = 'input window, operand 2, single buffered']
    #allocation8 [shape = 'u8[16384]{0}', space=vmem, size = 0x4000, scoped, tag = 'input window, operand 3, single buffered']
    #allocation9 [shape = 's32[1]{0}', space=sflag, size = 0x4, scoped, tag = 'scoped memory for psp2_head.2']
    #allocation10 [shape = 'u8[8192]{0}', space=vmem, size = 0x2000, scoped, tag = 'input window, operand 4']
    #allocation11 [shape = 'u8[65536]{0}', space=vmem, size = 0x10000, scoped, tag = 'input window, operand 5']
    #allocation12 [shape = 'u8[32768]{0}', space=vmem, size = 0x8000, scoped, tag = 'input window, operand 6, single buffered']
    #allocation13 [shape = 'u8[32768]{0}', space=vmem, size = 0x8000, scoped, tag = 'output window, operand 0']
    %12 = vsyncpa [#allocation3], 0
    %s13 = scalar_lea.sflag [#allocation3], 1
    %14 = vsyncpa %s13, 0
    %15 = vsyncpa [#allocation6], 0
    %16 = vsyncpa [#allocation9], 0
    %17 = vsyncpa [#allocation4], 0
    %s18 = scalar_lea.sflag [#allocation4], 1
    %19 = vsyncpa %s18, 0
    loop: start=0, step=1, limit=4
    $region2: #{psp2_head.2} parent=1 // loop_pre_header
      _
    $region3: #{psp2_head.2} parent=1 // loop_header
      %s21 = sphi 0, %s25
      %p22 = scmp.ge.s32.totalorder %s21, 4
      %s28 = sphi 0, %s40
      %s29 = sphi 0, %s36
      %s30 = sphi 0, %s28
      %s31 = sphi 0, %s29
      %s32 = sphi 0, %s30
      %s33 = sphi 0, %s31
      %s45 = sphi 0, %s47
      %s48 = sphi 0, %s45
      %s49 = sphi 0, %s48
      %s65 = sphi 0, %s49
      %s69 = sphi 0, %s69
      %s71 = sphi 0, %s69
      %s72 = sphi 0, %s71
      %s86 = sphi 0, %s72
      %s90 = sphi 0, %s90
      %s92 = sphi 0, %s90
      %s93 = sphi 0, %s92
      %s107 = sphi 0, %s93
      %s111 = sphi 0, %s111
      %s113 = sphi 0, %s111
      %s114 = sphi 0, %s113
      %s128 = sphi 0, %s114
      %s134 = sphi 0, %s136
      %s137 = sphi 0, %s134
      %s138 = sphi 0, %s137
      %s154 = sphi 0, %s138
      %s160 = sphi 0, %s162
      %s163 = sphi 0, %s160
      %s164 = sphi 0, %s163
      %s180 = sphi 0, %s164
      %s184 = sphi 0, %s184
      %s186 = sphi 0, %s184
      %s187 = sphi 0, %s186
      %s201 = sphi 0, %s187
      %s209 = sphi 0, %s211
      %s212 = sphi 0, %s209
      %s213 = sphi 0, %s212
      %s229 = sphi 0, %s213
    $region4: #{psp2_head.2} parent=1 // loop_header_branch
      %24 = sbr.rel (%p22) target = $region8
    $region5: #{psp2_head.2} parent=1 // loop_body
      %s26 = ssub.s32 %s21, 1
      %s27 = ssub.s32 %s21, 2
      %s34 = sadd.s32 1, %s29
      %p35 = scmp.ge.s32.totalorder %s34, 1
      %s36 = scalar_select %p35, 0, %s34
      %s37 = sadd.s32 1, %s28
      %s38 = scalar_select %p35, %s37, %s28
      %p39 = scmp.ge.s32.totalorder %s38, 2
      %s40 = scalar_select %p39, 0, %s38
      %s41 = ssub.s32 %s28, %s40
      %s42 = ssub.s32 %s29, %s36
      %s43 = sor.u32 %s41, %s42
      %p44 = scmp.eq.s32.totalorder %s43, 0
      %s46 = sadd.s32 %s45, 1
      %s47 = scalar_select %p44, %s45, %s46
      %p50 = pneg %p44
      %p51 = scmp.eq.s32.totalorder %s21, 1
      %p52 = por %p50, %p51
      %p53 = scmp.ne.s32.totalorder %s45, %s48
      %p54 = scmp.eq.s32.totalorder %s21, 0
      %p55 = por %p53, %p54
      %p56 = scmp.ne.s32.totalorder %s45, %s48
      %p57 = scmp.eq.s32.totalorder %s26, 1
      %p58 = por %p56, %p57
      %p59 = scmp.ne.s32.totalorder %s48, %s49
      %p60 = scmp.eq.s32.totalorder %s26, 0
      %p61 = por %p59, %p60
      %p62 = scmp.ne.s32.totalorder %s48, %s49
      %p63 = scmp.eq.s32.totalorder %s27, 1
      %p64 = por %p62, %p63
      %p66 = scmp.ne.s32.totalorder %s49, %s65
      %p67 = scmp.eq.s32.totalorder %s27, 0
      %p68 = por %p66, %p67
      %s70 = sadd.s32 %s69, 1
      %p73 = scmp.eq.s32.totalorder %s21, 1
      %p74 = scmp.ne.s32.totalorder %s69, %s71
      %p75 = scmp.eq.s32.totalorder %s21, 0
      %p76 = por %p74, %p75
      %p77 = scmp.ne.s32.totalorder %s69, %s71
      %p78 = scmp.eq.s32.totalorder %s26, 1
      %p79 = por %p77, %p78
      %p80 = scmp.ne.s32.totalorder %s71, %s72
      %p81 = scmp.eq.s32.totalorder %s26, 0
      %p82 = por %p80, %p81
      %p83 = scmp.ne.s32.totalorder %s71, %s72
      %p84 = scmp.eq.s32.totalorder %s27, 1
      %p85 = por %p83, %p84
      %p87 = scmp.ne.s32.totalorder %s72, %s86
      %p88 = scmp.eq.s32.totalorder %s27, 0
      %p89 = por %p87, %p88
      %s91 = sadd.s32 %s90, 1
      %p94 = scmp.eq.s32.totalorder %s21, 1
      %p95 = scmp.ne.s32.totalorder %s90, %s92
      %p96 = scmp.eq.s32.totalorder %s21, 0
      %p97 = por %p95, %p96
      %p98 = scmp.ne.s32.totalorder %s90, %s92
      %p99 = scmp.eq.s32.totalorder %s26, 1
      %p100 = por %p98, %p99
      %p101 = scmp.ne.s32.totalorder %s92, %s93
      %p102 = scmp.eq.s32.totalorder %s26, 0
      %p103 = por %p101, %p102
      %p104 = scmp.ne.s32.totalorder %s92, %s93
      %p105 = scmp.eq.s32.totalorder %s27, 1
      %p106 = por %p104, %p105
      %p108 = scmp.ne.s32.totalorder %s93, %s107
      %p109 = scmp.eq.s32.totalorder %s27, 0
      %p110 = por %p108, %p109
      %s112 = sadd.s32 %s111, 1
      %p115 = scmp.eq.s32.totalorder %s21, 1
      %p116 = scmp.ne.s32.totalorder %s111, %s113
      %p117 = scmp.eq.s32.totalorder %s21, 0
      %p118 = por %p116, %p117
      %p119 = scmp.ne.s32.totalorder %s111, %s113
      %p120 = scmp.eq.s32.totalorder %s26, 1
      %p121 = por %p119, %p120
      %p122 = scmp.ne.s32.totalorder %s113, %s114
      %p123 = scmp.eq.s32.totalorder %s26, 0
      %p124 = por %p122, %p123
      %p125 = scmp.ne.s32.totalorder %s113, %s114
      %p126 = scmp.eq.s32.totalorder %s27, 1
      %p127 = por %p125, %p126
      %p129 = scmp.ne.s32.totalorder %s114, %s128
      %p130 = scmp.eq.s32.totalorder %s27, 0
      %p131 = por %p129, %p130
      %s132 = ssub.s32 %s28, %s40
      %p133 = scmp.eq.s32.totalorder %s132, 0
      %s135 = sadd.s32 %s134, 1
      %s136 = scalar_select %p133, %s134, %s135
      %p139 = pneg %p133
      %p140 = scmp.eq.s32.totalorder %s21, 1
      %p141 = por %p139, %p140
      %p142 = scmp.ne.s32.totalorder %s134, %s137
      %p143 = scmp.eq.s32.totalorder %s21, 0
      %p144 = por %p142, %p143
      %p145 = scmp.ne.s32.totalorder %s134, %s137
      %p146 = scmp.eq.s32.totalorder %s26, 1
      %p147 = por %p145, %p146
      %p148 = scmp.ne.s32.totalorder %s137, %s138
      %p149 = scmp.eq.s32.totalorder %s26, 0
      %p150 = por %p148, %p149
      %p151 = scmp.ne.s32.totalorder %s137, %s138
      %p152 = scmp.eq.s32.totalorder %s27, 1
      %p153 = por %p151, %p152
      %p155 = scmp.ne.s32.totalorder %s138, %s154
      %p156 = scmp.eq.s32.totalorder %s27, 0
      %p157 = por %p155, %p156
      %s158 = ssub.s32 %s28, %s40
      %p159 = scmp.eq.s32.totalorder %s158, 0
      %s161 = sadd.s32 %s160, 1
      %s162 = scalar_select %p159, %s160, %s161
      %p165 = pneg %p159
      %p166 = scmp.eq.s32.totalorder %s21, 1
      %p167 = por %p165, %p166
      %p168 = scmp.ne.s32.totalorder %s160, %s163
      %p169 = scmp.eq.s32.totalorder %s21, 0
      %p170 = por %p168, %p169
      %p171 = scmp.ne.s32.totalorder %s160, %s163
      %p172 = scmp.eq.s32.totalorder %s26, 1
      %p173 = por %p171, %p172
      %p174 = scmp.ne.s32.totalorder %s163, %s164
      %p175 = scmp.eq.s32.totalorder %s26, 0
      %p176 = por %p174, %p175
      %p177 = scmp.ne.s32.totalorder %s163, %s164
      %p178 = scmp.eq.s32.totalorder %s27, 1
      %p179 = por %p177, %p178
      %p181 = scmp.ne.s32.totalorder %s164, %s180
      %p182 = scmp.eq.s32.totalorder %s27, 0
      %p183 = por %p181, %p182
      %s185 = sadd.s32 %s184, 1
      %p188 = scmp.eq.s32.totalorder %s21, 1
      %p189 = scmp.ne.s32.totalorder %s184, %s186
      %p190 = scmp.eq.s32.totalorder %s21, 0
      %p191 = por %p189, %p190
      %p192 = scmp.ne.s32.totalorder %s184, %s186
      %p193 = scmp.eq.s32.totalorder %s26, 1
      %p194 = por %p192, %p193
      %p195 = scmp.ne.s32.totalorder %s186, %s187
      %p196 = scmp.eq.s32.totalorder %s26, 0
      %p197 = por %p195, %p196
      %p198 = scmp.ne.s32.totalorder %s186, %s187
      %p199 = scmp.eq.s32.totalorder %s27, 1
      %p200 = por %p198, %p199
      %p202 = scmp.ne.s32.totalorder %s187, %s201
      %p203 = scmp.eq.s32.totalorder %s27, 0
      %p204 = por %p202, %p203
      %s205 = ssub.s32 %s28, %s40
      %s206 = ssub.s32 %s29, %s36
      %s207 = sor.u32 %s205, %s206
      %p208 = scmp.eq.s32.totalorder %s207, 0
      %s210 = sadd.s32 %s209, 1
      %s211 = scalar_select %p208, %s209, %s210
      %p214 = pneg %p208
      %p215 = scmp.eq.s32.totalorder %s21, 1
      %p216 = por %p214, %p215
      %p217 = scmp.ne.s32.totalorder %s209, %s212
      %p218 = scmp.eq.s32.totalorder %s21, 0
      %p219 = por %p217, %p218
      %p220 = scmp.ne.s32.totalorder %s209, %s212
      %p221 = scmp.eq.s32.totalorder %s26, 1
      %p222 = por %p220, %p221
      %p223 = scmp.ne.s32.totalorder %s212, %s213
      %p224 = scmp.eq.s32.totalorder %s26, 0
      %p225 = por %p223, %p224
      %p226 = scmp.ne.s32.totalorder %s212, %s213
      %p227 = scmp.eq.s32.totalorder %s27, 1
      %p228 = por %p226, %p227
      %p230 = scmp.ne.s32.totalorder %s213, %s229
      %p231 = scmp.eq.s32.totalorder %s27, 0
      %p232 = por %p230, %p231
      %p233 = scmp.le.s32.totalorder 1, %s21
      %p234 = scmp.lt.s32.totalorder %s21, 3
      %p235 = pnand %p233, %p234
      %p236 = pneg %p235
      // Predicated region
      $region9: #{psp2_head.2} parent=5 // pred_check
        _
      $region10: #{psp2_head.2} parent=5 // pred_check_branch
        %238 = sbr.rel (%p235) target = $region12
      $region11: #{psp2_head.2} parent=5 // pred_region
        %s239 = ssub.s32 %s21, 1
        // Predicated region
        $region13: #{psp2_head.2} parent=11 // pred_check
          %p240 = pneg %p82
        $region14: #{psp2_head.2} parent=11 // pred_check_branch
          %242 = sbr.rel (%p240) target = $region16
        $region15: #{psp2_head.2} parent=11 // pred_region
          %s244 = ssub.s32 256, 256
          %245 = vsyncadd [#allocation6], %s244
          %s246 = sshll.u32 [#allocation5], 4
          %s247 = int_to_ptr.vmem [resolvable:$true] %s246
          %252 = dma.hbm_to_vmem [thread:$0]  %s1, 256, %s247, [#allocation6], 64, 64, 4
        $region16: #{psp2_head.2} parent=11 // pred_fallthru
          _
        // Predicated region
        $region17: #{psp2_head.2} parent=11 // pred_check
          %p253 = pneg %p103
        $region18: #{psp2_head.2} parent=11 // pred_check_branch
          %255 = sbr.rel (%p253) target = $region20
        $region19: #{psp2_head.2} parent=11 // pred_region
          %s257 = ssub.s32 512, 512
          %258 = vsyncadd [#allocation6], %s257
          %s259 = sshll.u32 [#allocation7], 4
          %s260 = int_to_ptr.vmem [resolvable:$true] %s259
          %265 = dma.hbm_to_vmem [thread:$0]  %s2, 512, %s260, [#allocation6], 128, 128, 8
        $region20: #{psp2_head.2} parent=11 // pred_fallthru
          _
        // Predicated region
        $region21: #{psp2_head.2} parent=11 // pred_check
          %p266 = pneg %p124
        $region22: #{psp2_head.2} parent=11 // pred_check_branch
          %268 = sbr.rel (%p266) target = $region24
        $region23: #{psp2_head.2} parent=11 // pred_region
          %s270 = ssub.s32 512, 512
          %271 = vsyncadd [#allocation9], %s270
          %s272 = sshll.u32 [#allocation8], 4
          %s273 = int_to_ptr.vmem [resolvable:$true] %s272
          %278 = dma.hbm_to_vmem [thread:$0]  %s3, 512, %s273, [#allocation9], 128, 128, 8
        $region24: #{psp2_head.2} parent=11 // pred_fallthru
          _
        // Predicated region
        $region25: #{psp2_head.2} parent=11 // pred_check
          %p279 = pneg %p197
        $region26: #{psp2_head.2} parent=11 // pred_check_branch
          %281 = sbr.rel (%p279) target = $region28
        $region27: #{psp2_head.2} parent=11 // pred_region
          %s283 = ssub.s32 1024, 1024
          %284 = vsyncadd [#allocation6], %s283
          %s285 = sshll.u32 [#allocation12], 4
          %s286 = int_to_ptr.vmem [resolvable:$true] %s285
          %291 = dma.hbm_to_vmem [thread:$0]  %s6, 1024, %s286, [#allocation6], 128, 128, 8
        $region28: #{psp2_head.2} parent=11 // pred_fallthru
          _
      $region12: #{psp2_head.2} parent=5 // pred_fallthru
        _
      %p292 = scmp.lt.s32.totalorder %s21, 2
      // Predicated region
      $region29: #{psp2_head.2} parent=5 // pred_check
        %p293 = pneg %p292
      $region30: #{psp2_head.2} parent=5 // pred_check_branch
        %295 = sbr.rel (%p293) target = $region32
      $region31: #{psp2_head.2} parent=5 // pred_region
        // Predicated region
        $region33: #{psp2_head.2} parent=31 // pred_check
          %p296 = pneg %p55
        $region34: #{psp2_head.2} parent=31 // pred_check_branch
          %298 = sbr.rel (%p296) target = $region36
        $region35: #{psp2_head.2} parent=31 // pred_region
          %s299 = sand.u32 %s21, 1
          %s300 = scalar_lea.sflag [#allocation3], %s299
          %s301 = sand.u32 %s45, 1
          %s302 = smul.addr %s301, 32
          %s303 = scalar_lea.vmem [#allocation2], %s302
          %s304 = smul.u32 2, %s29
          %s306 = ssub.s32 512, 512
          %307 = vsyncadd %s300, %s306
          %s308 = smul.addr %s28, 8
          %s309 = sadd.s32 %s304, %s308
          %s310 = smul.addr %s309, 64
          %s311 = scalar_lea.hbm %s0, %s310
          %s312 = sshll.u32 %s303, 4
          %s313 = int_to_ptr.vmem [resolvable:$true] %s312
          %318 = dma.hbm_to_vmem [thread:$0]  %s311, 512, %s313, %s300, 128, 128, 8
        $region36: #{psp2_head.2} parent=31 // pred_fallthru
          _
        // Predicated region
        $region37: #{psp2_head.2} parent=31 // pred_check
          %p319 = pneg %p144
        $region38: #{psp2_head.2} parent=31 // pred_check_branch
          %321 = sbr.rel (%p319) target = $region40
        $region39: #{psp2_head.2} parent=31 // pred_region
          %s322 = sand.u32 %s21, 1
          %s323 = scalar_lea.sflag [#allocation3], %s322
          %s324 = sand.u32 %s134, 1
          %s325 = smul.addr %s324, 8
          %s326 = scalar_lea.vmem [#allocation10], %s325
          %s328 = ssub.s32 128, 128
          %329 = vsyncadd %s323, %s328
          %s330 = smul.addr %s28, 128
          %s331 = scalar_lea.hbm %s4, %s330
          %s333 = sshll.u32 %s326, 4
          %s334 = int_to_ptr.vmem [resolvable:$true] %s333
          %336 = dma.hbm_to_vmem [thread:$0]  %s331, 128, %s334, %s323
        $region40: #{psp2_head.2} parent=31 // pred_fallthru
          _
        // Predicated region
        $region41: #{psp2_head.2} parent=31 // pred_check
          %p337 = pneg %p170
        $region42: #{psp2_head.2} parent=31 // pred_check_branch
          %339 = sbr.rel (%p337) target = $region44
        $region43: #{psp2_head.2} parent=31 // pred_region
          %s340 = sand.u32 %s21, 1
          %s341 = scalar_lea.sflag [#allocation3], %s340
          %s342 = sand.u32 %s160, 1
          %s343 = smul.addr %s342, 64
          %s344 = scalar_lea.vmem [#allocation11], %s343
          %s346 = ssub.s32 1024, 1024
          %347 = vsyncadd %s341, %s346
          %s348 = smul.addr %s28, 8
          %s349 = smul.addr %s348, 128
          %s350 = scalar_lea.hbm %s5, %s349
          %s351 = sshll.u32 %s344, 4
          %s352 = int_to_ptr.vmem [resolvable:$true] %s351
          %357 = dma.hbm_to_vmem [thread:$0]  %s350, 1024, %s352, %s341, 128, 128, 8
        $region44: #{psp2_head.2} parent=31 // pred_fallthru
          _
      $region32: #{psp2_head.2} parent=5 // pred_fallthru
        _
      %p358 = scmp.le.s32.totalorder 1, %s21
      %p359 = scmp.lt.s32.totalorder %s21, 3
      %p360 = pnand %p358, %p359
      %p361 = pneg %p360
      // Predicated region
      $region45: #{psp2_head.2} parent=5 // pred_check
        _
      $region46: #{psp2_head.2} parent=5 // pred_check_branch
        %363 = sbr.rel (%p360) target = $region48
      $region47: #{psp2_head.2} parent=5 // pred_region
        %s364 = ssub.s32 %s21, 1
        %s365 = sand.u32 %s26, 1
        %s366 = scalar_lea.sflag [#allocation3], %s365
        %s367 = sand.u32 %s48, 1
        %s368 = smul.addr %s367, 32
        %s369 = scalar_lea.vmem [#allocation2], %s368
        // Predicated region
        $region49: #{psp2_head.2} parent=47 // pred_check
          %p370 = pneg %p61
        $region50: #{psp2_head.2} parent=47 // pred_check_branch
          %372 = sbr.rel (%p370) target = $region52
        $region51: #{psp2_head.2} parent=47 // pred_region
          %373 = dma.done %s366, 512
        $region52: #{psp2_head.2} parent=47 // pred_fallthru
          _
        // Predicated region
        $region53: #{psp2_head.2} parent=47 // pred_check
          %p374 = pneg %p82
        $region54: #{psp2_head.2} parent=47 // pred_check_branch
          %376 = sbr.rel (%p374) target = $region56
        $region55: #{psp2_head.2} parent=47 // pred_region
          %377 = dma.done [#allocation6], 256
        $region56: #{psp2_head.2} parent=47 // pred_fallthru
          _
        // Predicated region
        $region57: #{psp2_head.2} parent=47 // pred_check
          %p378 = pneg %p103
        $region58: #{psp2_head.2} parent=47 // pred_check_branch
          %380 = sbr.rel (%p378) target = $region60
        $region59: #{psp2_head.2} parent=47 // pred_region
          %381 = dma.done [#allocation6], 512
        $region60: #{psp2_head.2} parent=47 // pred_fallthru
          _
        // Predicated region
        $region61: #{psp2_head.2} parent=47 // pred_check
          %p382 = pneg %p124
        $region62: #{psp2_head.2} parent=47 // pred_check_branch
          %384 = sbr.rel (%p382) target = $region64
        $region63: #{psp2_head.2} parent=47 // pred_region
          %385 = dma.done [#allocation9], 512
        $region64: #{psp2_head.2} parent=47 // pred_fallthru
          _
        %s386 = sand.u32 %s26, 1
        %s387 = scalar_lea.sflag [#allocation3], %s386
        %s388 = sand.u32 %s137, 1
        %s389 = smul.addr %s388, 8
        %s390 = scalar_lea.vmem [#allocation10], %s389
        // Predicated region
        $region65: #{psp2_head.2} parent=47 // pred_check
          %p391 = pneg %p150
        $region66: #{psp2_head.2} parent=47 // pred_check_branch
          %393 = sbr.rel (%p391) target = $region68
        $region67: #{psp2_head.2} parent=47 // pred_region
          %394 = dma.done %s387, 128
        $region68: #{psp2_head.2} parent=47 // pred_fallthru
          _
        %s395 = sand.u32 %s26, 1
        %s396 = scalar_lea.sflag [#allocation3], %s395
        %s397 = sand.u32 %s163, 1
        %s398 = smul.addr %s397, 64
        %s399 = scalar_lea.vmem [#allocation11], %s398
        // Predicated region
        $region69: #{psp2_head.2} parent=47 // pred_check
          %p400 = pneg %p176
        $region70: #{psp2_head.2} parent=47 // pred_check_branch
          %402 = sbr.rel (%p400) target = $region72
        $region71: #{psp2_head.2} parent=47 // pred_region
          %403 = dma.done %s396, 1024
        $region72: #{psp2_head.2} parent=47 // pred_fallthru
          _
        // Predicated region
        $region73: #{psp2_head.2} parent=47 // pred_check
          %p404 = pneg %p197
        $region74: #{psp2_head.2} parent=47 // pred_check_branch
          %406 = sbr.rel (%p404) target = $region76
        $region75: #{psp2_head.2} parent=47 // pred_region
          %407 = dma.done [#allocation6], 1024
        $region76: #{psp2_head.2} parent=47 // pred_fallthru
          _
        %s408 = sand.u32 %s26, 1
        %s409 = scalar_lea.sflag [#allocation3], %s408
        %s410 = sand.u32 %s48, 1
        %s411 = smul.addr %s410, 32
        %s412 = scalar_lea.vmem [#allocation2], %s411
        %p413 = pneg %p61
        %p414 = pneg %p58
        %p415 = pneg %p82
        %p416 = pneg %p79
        %p417 = pneg %p103
        %p418 = pneg %p100
        %p419 = pneg %p124
        %p420 = pneg %p121
        %s421 = sand.u32 %s26, 1
        %s422 = scalar_lea.sflag [#allocation3], %s421
        %s423 = sand.u32 %s137, 1
        %s424 = smul.addr %s423, 8
        %s425 = scalar_lea.vmem [#allocation10], %s424
        %p426 = pneg %p150
        %p427 = pneg %p147
        %s428 = sand.u32 %s26, 1
        %s429 = scalar_lea.sflag [#allocation3], %s428
        %s430 = sand.u32 %s163, 1
        %s431 = smul.addr %s430, 64
        %s432 = scalar_lea.vmem [#allocation11], %s431
        %p433 = pneg %p176
        %p434 = pneg %p173
        %p435 = pneg %p197
        %p436 = pneg %p194
        %p437 = pneg %p225
        %p438 = pneg %p222
        %s439 = sand.u32 %s212, 1
        %s440 = scalar_lea.sflag [#allocation4], %s439
        %s441 = sand.u32 %s212, 1
        %s442 = smul.addr %s441, 32
        %s443 = scalar_lea.vmem [#allocation13], %s442
        %s444 = smul.u32 2, %s31
        %s445 = smul.u32 2, %s31
        %v447 = vld [vmem:[%s369] sm:$0xff]
        %v448 = vld [vmem:[%s369 + $0x8] sm:$0xff]
        %v449 = vld [vmem:[%s369 + $0x10] sm:$0xff]
        %v450 = vld [vmem:[%s369 + $0x18] sm:$0xff]
        %v451 = vld [vmem:[#allocation5] sm:$0xf]
        %v452 = vld [vmem:[#allocation5 + $0x4] sm:$0xf]
        %v453 = vld [vmem:[#allocation5 + $0x8] sm:$0xf]
        %v454 = vld [vmem:[#allocation5 + $0xc] sm:$0xf]
        %v459 = vunpack.c.l.b16 %v451
        %v460 = vunpack.c.l.b16 %v452
        %v461 = vunpack.c.l.b16 %v453
        %v462 = vunpack.c.l.b16 %v454
        %v463 = vpack.c.b16 %v460, %v459
        %v464 = vpack.c.b16 %v462, %v461
        %v469 = vunpack.c.l.b16 %v447
        %v470 = vunpack.c.h.b16 %v447
        %v471 = vunpack.c.l.b16 %v448
        %v472 = vunpack.c.h.b16 %v448
        %v473 = vunpack.c.l.b16 %v449
        %v474 = vunpack.c.h.b16 %v449
        %v475 = vunpack.c.l.b16 %v450
        %v476 = vunpack.c.h.b16 %v450
        %v477 = vpack.c.b16 %v471, %v469
        %v478 = vpack.c.b16 %v472, %v470
        %v479 = vpack.c.b16 %v475, %v473
        %v480 = vpack.c.b16 %v476, %v474
        %vm485 = vcmask 261120
        %v487 = vsel %vm485, %v463, 0
        %v490 = vsel %vm485, %v464, 0
        %492 = vmatprep.subr.bf16.mxu0 %v478
        %493 = vmatpush1.bf16.msra.mxu0 %v477
        %494 = vmatprep.subr.bf16.mxu0 %v480
        %495 = vmatpush1.bf16.msra.mxu0 %v479
        %496 = vmatprep.subr.bf16.mxu0 0
        %497 = vmatpush1.bf16.msra.mxu0 0
        %498 = vmatprep.subr.bf16.mxu0 0
        %499 = vmatpush1.bf16.msra.mxu0 0
        %500 = vmatprep.subr.bf16.mxu0 0
        %501 = vmatpush1.bf16.msra.mxu0 0
        %502 = vmatprep.subr.bf16.mxu0 0
        %503 = vmatpush1.bf16.msra.mxu0 0
        %504 = vmatprep.subr.bf16.mxu0 0
        %505 = vmatpush1.bf16.msra.mxu0 0
        %506 = vmatprep.subr.bf16.mxu0 0
        %507 = vmatpush1.bf16.msra.mxu0 0
        %508 = vmatprep.subr.bf16.mxu0 0
        %509 = vmatpush1.bf16.msra.mxu0 0
        %510 = vmatprep.subr.bf16.mxu0 0
        %511 = vmatpush1.bf16.msra.mxu0 0
        %512 = vmatprep.subr.bf16.mxu0 0
        %513 = vmatpush1.bf16.msra.mxu0 0
        %514 = vmatprep.subr.bf16.mxu0 0
        %515 = vmatpush1.bf16.msra.mxu0 0
        %516 = vmatprep.subr.bf16.mxu0 0
        %517 = vmatpush1.bf16.msra.mxu0 0
        %518 = vmatprep.subr.bf16.mxu0 0
        %519 = vmatpush1.bf16.msra.mxu0 0
        %520 = vmatprep.subr.bf16.mxu0 0
        %521 = vmatpush1.bf16.msra.mxu0 0
        %522 = vmatprep.subr.bf16.mxu0 0
        %523 = vmatpush1.bf16.msra.mxu0 0
        %524 = vmatprep.mubr.bf16.mxu0 0
        %525 = vmatmul.mubr.bf16.gmra.mrb[0].mxu0 %v487
        %v526 = vpop.f32.mrb[0].mxu0
        %v527 = vadd.f32 0.0, %v526
        %v528 = vpop.f32.mrb[0].mxu0
        %v529 = vadd.f32 0.0, %v528
        %v530 = vpop.f32.mrb[0].mxu0
        %v531 = vadd.f32 0.0, %v530
        %v532 = vpop.f32.mrb[0].mxu0
        %v533 = vadd.f32 0.0, %v532
        %534 = vmatprep.mubr.bf16.mxu0 0
        %535 = vmatmul.mubr.bf16.gmra.mrb[0].mxu0 %v490
        %v536 = vpop.f32.mrb[0].mxu0
        %v537 = vadd.f32 0.0, %v536
        %v538 = vpop.f32.mrb[0].mxu0
        %v539 = vadd.f32 0.0, %v538
        %v540 = vpop.f32.mrb[0].mxu0
        %v541 = vadd.f32 0.0, %v540
        %v542 = vpop.f32.mrb[0].mxu0
        %v543 = vadd.f32 0.0, %v542
        %544 = vdwg.mxu0
        %v545 = vld [vmem:[#allocation7] sm:$0xff]
        %v546 = vld [vmem:[#allocation7 + $0x8] sm:$0xff]
        %v547 = vld [vmem:[#allocation7 + $0x10] sm:$0xff]
        %v548 = vld [vmem:[#allocation7 + $0x18] sm:$0xff]
        %550 = vset.pattern.permute.xlu0 0
        %551 = vperm.xlu0 %550, %v545
        %v552 = vpop.permute.xlu0 %551
        %555 = vset.pattern.permute.xlu0 0
        %556 = vperm.xlu0 %555, %v546
        %v557 = vpop.permute.xlu0 %556
        %560 = vset.pattern.permute.xlu0 0
        %561 = vperm.xlu0 %560, %v547
        %v562 = vpop.permute.xlu0 %561
        %565 = vset.pattern.permute.xlu0 0
        %566 = vperm.xlu0 %565, %v548
        %v567 = vpop.permute.xlu0 %566
        %v569 = vmul.f32 %v527, %v552
        %v570 = vmul.f32 %v529, %v552
        %v571 = vmul.f32 %v531, %v557
        %v572 = vmul.f32 %v533, %v557
        %v573 = vmul.f32 %v537, %v562
        %v574 = vmul.f32 %v539, %v562
        %v575 = vmul.f32 %v541, %v567
        %v576 = vmul.f32 %v543, %v567
        %v577 = vld [vmem:[#allocation8] sm:$0xff]
        %v578 = vld [vmem:[#allocation8 + $0x8] sm:$0xff]
        %v579 = vld [vmem:[#allocation8 + $0x10] sm:$0xff]
        %v580 = vld [vmem:[#allocation8 + $0x18] sm:$0xff]
        %582 = vset.pattern.permute.xlu0 0
        %583 = vperm.xlu0 %582, %v577
        %v584 = vpop.permute.xlu0 %583
        %587 = vset.pattern.permute.xlu0 0
        %588 = vperm.xlu0 %587, %v578
        %v589 = vpop.permute.xlu0 %588
        %592 = vset.pattern.permute.xlu0 0
        %593 = vperm.xlu0 %592, %v579
        %v594 = vpop.permute.xlu0 %593
        %597 = vset.pattern.permute.xlu0 0
        %598 = vperm.xlu0 %597, %v580
        %v599 = vpop.permute.xlu0 %598
        %v601 = vadd.f32 %v569, %v584
        %v602 = vadd.f32 %v570, %v584
        %v603 = vadd.f32 %v571, %v589
        %v604 = vadd.f32 %v572, %v589
        %v605 = vadd.f32 %v573, %v594
        %v606 = vadd.f32 %v574, %v594
        %v607 = vadd.f32 %v575, %v599
        %v608 = vadd.f32 %v576, %v599
        %v609 = vmax.f32 %v601, 0.0
        %v610 = vmax.f32 %v602, 0.0
        %v611 = vmax.f32 %v603, 0.0
        %v612 = vmax.f32 %v604, 0.0
        %v613 = vmax.f32 %v605, 0.0
        %v614 = vmax.f32 %v606, 0.0
        %v615 = vmax.f32 %v607, 0.0
        %v616 = vmax.f32 %v608, 0.0
        %v617 = vld [vmem:[%s390] sm:$0xff]
        %619 = vset.pattern.permute.xlu0 0
        %620 = vperm.xlu0 %619, %v617
        %v621 = vpop.permute.xlu0 %620
        %v623 = vadd.f32 %v609, %v621
        %v624 = vadd.f32 %v610, %v621
        %v625 = vld [vmem:[%s399] sm:$0xff]
        %v626 = vld [vmem:[%s399 + $0x8] sm:$0xff]
        %v627 = vld [vmem:[%s399 + $0x10] sm:$0xff]
        %v628 = vld [vmem:[%s399 + $0x18] sm:$0xff]
        %v629 = vld [vmem:[%s399 + $0x20] sm:$0xff]
        %v630 = vld [vmem:[%s399 + $0x28] sm:$0xff]
        %v631 = vld [vmem:[%s399 + $0x30] sm:$0xff]
        %v632 = vld [vmem:[%s399 + $0x38] sm:$0xff]
        %v633 = vld [vmem:[#allocation12] sm:$0xff]
        %v634 = vld [vmem:[#allocation12 + $0x8] sm:$0xff]
        %v635 = vld [vmem:[#allocation12 + $0x10] sm:$0xff]
        %v636 = vld [vmem:[#allocation12 + $0x18] sm:$0xff]
        %v637 = vld [vmem:[#allocation12 + $0x20] sm:$0xff]
        %v638 = vld [vmem:[#allocation12 + $0x28] sm:$0xff]
        %v639 = vld [vmem:[#allocation12 + $0x30] sm:$0xff]
        %v640 = vld [vmem:[#allocation12 + $0x38] sm:$0xff]
        %642 = vset.pattern.permute.xlu0 0
        %643 = vperm.xlu0 %642, %v633
        %v644 = vpop.permute.xlu0 %643
        %647 = vset.pattern.permute.xlu0 0
        %648 = vperm.xlu0 %647, %v634
        %v649 = vpop.permute.xlu0 %648
        %652 = vset.pattern.permute.xlu0 0
        %653 = vperm.xlu0 %652, %v635
        %v654 = vpop.permute.xlu0 %653
        %657 = vset.pattern.permute.xlu0 0
        %658 = vperm.xlu0 %657, %v636
        %v659 = vpop.permute.xlu0 %658
        %662 = vset.pattern.permute.xlu0 0
        %663 = vperm.xlu0 %662, %v637
        %v664 = vpop.permute.xlu0 %663
        %667 = vset.pattern.permute.xlu0 0
        %668 = vperm.xlu0 %667, %v638
        %v669 = vpop.permute.xlu0 %668
        %672 = vset.pattern.permute.xlu0 0
        %673 = vperm.xlu0 %672, %v639
        %v674 = vpop.permute.xlu0 %673
        %677 = vset.pattern.permute.xlu0 0
        %678 = vperm.xlu0 %677, %v640
        %v679 = vpop.permute.xlu0 %678
        %vm681 = vcmask 195584
        %v683 = vsel %vm681, %v625, 0
        %v686 = vsel %vm681, %v626, 0
        %v689 = vsel %vm681, %v627, 0
        %v692 = vsel %vm681, %v628, 0
        %v695 = vsel %vm681, %v629, 0
        %v698 = vsel %vm681, %v630, 0
        %v701 = vsel %vm681, %v631, 0
        %v704 = vsel %vm681, %v632, 0
        %706 = vmatprep.subr.mxu0 %v612
        %707 = vmatpush1.msra.mxu0 %v611
        %708 = vmatprep.subr.mxu0 %v614
        %709 = vmatpush1.msra.mxu0 %v613
        %710 = vmatprep.subr.mxu0 %v616
        %711 = vmatpush1.msra.mxu0 %v615
        %712 = vmatprep.subr.mxu0 0.0
        %713 = vmatpush1.msra.mxu0 0.0
        %714 = vmatprep.subr.mxu0 0.0
        %715 = vmatpush1.msra.mxu0 0.0
        %716 = vmatprep.subr.mxu0 0.0
        %717 = vmatpush1.msra.mxu0 0.0
        %718 = vmatprep.subr.mxu0 0.0
        %719 = vmatpush1.msra.mxu0 0.0
        %720 = vmatprep.subr.mxu0 0.0
        %721 = vmatpush1.msra.mxu0 0.0
        %722 = vmatprep.subr.mxu0 0.0
        %723 = vmatpush1.msra.mxu0 0.0
        %724 = vmatprep.subr.mxu0 0.0
        %725 = vmatpush1.msra.mxu0 0.0
        %726 = vmatprep.subr.mxu0 0.0
        %727 = vmatpush1.msra.mxu0 0.0
        %728 = vmatprep.subr.mxu0 0.0
        %729 = vmatpush1.msra.mxu0 0.0
        %730 = vmatprep.subr.mxu0 0.0
        %731 = vmatpush1.msra.mxu0 0.0
        %732 = vmatprep.subr.mxu0 0.0
        %733 = vmatpush1.msra.mxu0 0.0
        %734 = vmatprep.subr.mxu0 0.0
        %735 = vmatpush1.msra.mxu0 0.0
        %736 = vmatprep.subr.mxu0 0.0
        %737 = vmatpush1.msra.mxu0 0.0
        %738 = vmatprep.subr.mxu0 0.0
        %739 = vmatpush1.msra.mxu0 0.0
        %740 = vmatprep.subr.mxu0 0.0
        %741 = vmatpush1.msra.mxu0 0.0
        %742 = vmatprep.subr.mxu0 0.0
        %743 = vmatpush1.msra.mxu0 0.0
        %744 = vmatprep.subr.mxu0 0.0
        %745 = vmatpush1.msra.mxu0 0.0
        %746 = vmatprep.subr.mxu0 0.0
        %747 = vmatpush1.msra.mxu0 0.0
        %748 = vmatprep.subr.mxu0 0.0
        %749 = vmatpush1.msra.mxu0 0.0
        %750 = vmatprep.subr.mxu0 0.0
        %751 = vmatpush1.msra.mxu0 0.0
        %752 = vmatprep.subr.mxu0 0.0
        %753 = vmatpush1.msra.mxu0 0.0
        %754 = vmatprep.subr.mxu0 0.0
        %755 = vmatpush1.msra.mxu0 0.0
        %756 = vmatprep.subr.mxu0 0.0
        %757 = vmatpush1.msra.mxu0 0.0
        %758 = vmatprep.subr.mxu0 0.0
        %759 = vmatpush1.msra.mxu0 0.0
        %760 = vmatprep.subr.mxu0 0.0
        %761 = vmatpush1.msra.mxu0 0.0
        %762 = vmatprep.subr.mxu0 0.0
        %763 = vmatpush1.msra.mxu0 0.0
        %764 = vmatprep.subr.mxu0 0.0
        %765 = vmatpush1.msra.mxu0 0.0
        %766 = vmatprep.subr.mxu0 0.0
        %767 = vmatpush1.msra.mxu0 0.0
        %768 = vmatprep.subr.mxu0 0.0
        %769 = vmatpush1.msra.mxu0 0.0
        %770 = vmatprep.mubr.f32.mxu0 0.0
        %771 = vmatmul.mubr.f32.gmra.mrb[0].mxu0 %v683
        %v772 = vpop.f32.mrb[0].mxu0
        %v773 = vadd.f32 %v644, %v772
        %v774 = vpop.f32.mrb[0].mxu0
        %v775 = vadd.f32 %v644, %v774
        %776 = vmatprep.mubr.f32.mxu0 0.0
        %777 = vmatmul.mubr.f32.gmra.mrb[0].mxu0 %v686
        %v778 = vpop.f32.mrb[0].mxu0
        %v779 = vadd.f32 %v649, %v778
        %v780 = vpop.f32.mrb[0].mxu0
        %v781 = vadd.f32 %v649, %v780
        %782 = vmatprep.mubr.f32.mxu0 0.0
        %783 = vmatmul.mubr.f32.gmra.mrb[0].mxu0 %v689
        %v784 = vpop.f32.mrb[0].mxu0
        %v785 = vadd.f32 %v654, %v784
        %v786 = vpop.f32.mrb[0].mxu0
        %v787 = vadd.f32 %v654, %v786
        %788 = vmatprep.mubr.f32.mxu0 0.0
        %789 = vmatmul.mubr.f32.gmra.mrb[0].mxu0 %v692
        %v790 = vpop.f32.mrb[0].mxu0
        %v791 = vadd.f32 %v659, %v790
        %v792 = vpop.f32.mrb[0].mxu0
        %v793 = vadd.f32 %v659, %v792
        %794 = vmatprep.mubr.f32.mxu0 0.0
        %795 = vmatmul.mubr.f32.gmra.mrb[0].mxu0 %v695
        %v796 = vpop.f32.mrb[0].mxu0
        %v797 = vadd.f32 %v664, %v796
        %v798 = vpop.f32.mrb[0].mxu0
        %v799 = vadd.f32 %v664, %v798
        %800 = vmatprep.mubr.f32.mxu0 0.0
        %801 = vmatmul.mubr.f32.gmra.mrb[0].mxu0 %v698
        %v802 = vpop.f32.mrb[0].mxu0
        %v803 = vadd.f32 %v669, %v802
        %v804 = vpop.f32.mrb[0].mxu0
        %v805 = vadd.f32 %v669, %v804
        %806 = vmatprep.mubr.f32.mxu0 0.0
        %807 = vmatmul.mubr.f32.gmra.mrb[0].mxu0 %v701
        %v808 = vpop.f32.mrb[0].mxu0
        %v809 = vadd.f32 %v674, %v808
        %v810 = vpop.f32.mrb[0].mxu0
        %v811 = vadd.f32 %v674, %v810
        %812 = vmatprep.mubr.f32.mxu0 0.0
        %813 = vmatmul.mubr.f32.gmra.mrb[0].mxu0 %v704
        %v814 = vpop.f32.mrb[0].mxu0
        %v815 = vadd.f32 %v679, %v814
        %v816 = vpop.f32.mrb[0].mxu0
        %v817 = vadd.f32 %v679, %v816
        %818 = vdwg.mxu0
        %v819 = vrot.slane %v773, 4
        %v820 = vmax.f32 %v773, %v819
        %v821 = vrot.slane %v820, 2
        %v822 = vmax.f32 %v820, %v821
        %v823 = vrot.slane %v822, 1
        %v824 = vmax.f32 %v822, %v823
        %v825 = vrot.slane %v775, 4
        %v826 = vmax.f32 %v775, %v825
        %v827 = vrot.slane %v826, 2
        %v828 = vmax.f32 %v826, %v827
        %v829 = vrot.slane %v828, 1
        %v830 = vmax.f32 %v828, %v829
        %v831 = vsub.f32 %v773, %v824
        %v832 = vsub.f32 %v775, %v830
        %v833 = vmul.f32 %v831, 1.442695
        %v834 = vpow.pop %v833
        %v835 = vmul.f32 %v832, 1.442695
        %v836 = vpow.pop %v835
        %v837 = vrot.slane %v834, 4
        %v838 = vadd.f32 %v834, %v837
        %v839 = vrot.slane %v838, 2
        %v840 = vadd.f32 %v838, %v839
        %v841 = vrot.slane %v840, 1
        %v842 = vadd.f32 %v840, %v841
        %v843 = vrot.slane %v836, 4
        %v844 = vadd.f32 %v836, %v843
        %v845 = vrot.slane %v844, 2
        %v846 = vadd.f32 %v844, %v845
        %v847 = vrot.slane %v846, 1
        %v848 = vadd.f32 %v846, %v847
        %v849 = vrcp.pop %v842
        %v850 = vmul.f32 %v834, %v849
        %v851 = vrcp.pop %v848
        %v852 = vmul.f32 %v836, %v851
        %v853 = vmax.f32 %v779, %v785
        %v854 = vrot.slane %v853, 4
        %v855 = vmax.f32 %v853, %v854
        %v856 = vrot.slane %v855, 2
        %v857 = vmax.f32 %v855, %v856
        %v858 = vrot.slane %v857, 1
        %v859 = vmax.f32 %v857, %v858
        %v860 = vmax.f32 %v781, %v787
        %v861 = vrot.slane %v860, 4
        %v862 = vmax.f32 %v860, %v861
        %v863 = vrot.slane %v862, 2
        %v864 = vmax.f32 %v862, %v863
        %v865 = vrot.slane %v864, 1
        %v866 = vmax.f32 %v864, %v865
        %v867 = vsub.f32 %v779, %v859
        %v868 = vsub.f32 %v781, %v866
        %v869 = vsub.f32 %v785, %v859
        %v870 = vsub.f32 %v787, %v866
        %v871 = vmul.f32 %v867, 1.442695
        %v872 = vpow.pop %v871
        %v873 = vmul.f32 %v868, 1.442695
        %v874 = vpow.pop %v873
        %v875 = vmul.f32 %v869, 1.442695
        %v876 = vpow.pop %v875
        %v877 = vmul.f32 %v870, 1.442695
        %v878 = vpow.pop %v877
        %v879 = vadd.f32 %v872, %v876
        %v880 = vrot.slane %v879, 4
        %v881 = vadd.f32 %v879, %v880
        %v882 = vrot.slane %v881, 2
        %v883 = vadd.f32 %v881, %v882
        %v884 = vrot.slane %v883, 1
        %v885 = vadd.f32 %v883, %v884
        %v886 = vadd.f32 %v874, %v878
        %v887 = vrot.slane %v886, 4
        %v888 = vadd.f32 %v886, %v887
        %v889 = vrot.slane %v888, 2
        %v890 = vadd.f32 %v888, %v889
        %v891 = vrot.slane %v890, 1
        %v892 = vadd.f32 %v890, %v891
        %v893 = vrcp.pop %v885
        %v894 = vmul.f32 %v872, %v893
        %v895 = vrcp.pop %v892
        %v896 = vmul.f32 %v874, %v895
        %v897 = vmul.f32 %v876, %v893
        %v898 = vmul.f32 %v878, %v895
        %v899 = vmax.f32 %v791, %v803
        %v900 = vmax.f32 %v797, %v809
        %v901 = vmax.f32 %v899, %v815
        %v902 = vmax.f32 %v901, %v900
        %v903 = vrot.slane %v902, 4
        %v904 = vmax.f32 %v902, %v903
        %v905 = vrot.slane %v904, 2
        %v906 = vmax.f32 %v904, %v905
        %v907 = vrot.slane %v906, 1
        %v908 = vmax.f32 %v906, %v907
        %v909 = vmax.f32 %v793, %v805
        %v910 = vmax.f32 %v799, %v811
        %v911 = vmax.f32 %v909, %v817
        %v912 = vmax.f32 %v911, %v910
        %v913 = vrot.slane %v912, 4
        %v914 = vmax.f32 %v912, %v913
        %v915 = vrot.slane %v914, 2
        %v916 = vmax.f32 %v914, %v915
        %v917 = vrot.slane %v916, 1
        %v918 = vmax.f32 %v916, %v917
        %v919 = vsub.f32 %v791, %v908
        %v920 = vsub.f32 %v793, %v918
        %v921 = vsub.f32 %v797, %v908
        %v922 = vsub.f32 %v799, %v918
        %v923 = vsub.f32 %v803, %v908
        %v924 = vsub.f32 %v805, %v918
        %v925 = vsub.f32 %v809, %v908
        %v926 = vsub.f32 %v811, %v918
        %v927 = vsub.f32 %v815, %v908
        %v928 = vsub.f32 %v817, %v918
        %v929 = vmul.f32 %v919, 1.442695
        %v930 = vpow.pop %v929
        %v931 = vmul.f32 %v920, 1.442695
        %v932 = vpow.pop %v931
        %v933 = vmul.f32 %v921, 1.442695
        %v934 = vpow.pop %v933
        %v935 = vmul.f32 %v922, 1.442695
        %v936 = vpow.pop %v935
        %v937 = vmul.f32 %v923, 1.442695
        %v938 = vpow.pop %v937
        %v939 = vmul.f32 %v924, 1.442695
        %v940 = vpow.pop %v939
        %v941 = vmul.f32 %v925, 1.442695
        %v942 = vpow.pop %v941
        %v943 = vmul.f32 %v926, 1.442695
        %v944 = vpow.pop %v943
        %v945 = vmul.f32 %v927, 1.442695
        %v946 = vpow.pop %v945
        %v947 = vmul.f32 %v928, 1.442695
        %v948 = vpow.pop %v947
        %v949 = vadd.f32 %v930, %v934
        %v950 = vadd.f32 %v949, %v938
        %v951 = vadd.f32 %v950, %v942
        %v952 = vadd.f32 %v951, %v946
        %v953 = vrot.slane %v952, 4
        %v954 = vadd.f32 %v952, %v953
        %v955 = vrot.slane %v954, 2
        %v956 = vadd.f32 %v954, %v955
        %v957 = vrot.slane %v956, 1
        %v958 = vadd.f32 %v956, %v957
        %v959 = vadd.f32 %v932, %v936
        %v960 = vadd.f32 %v959, %v940
        %v961 = vadd.f32 %v960, %v944
        %v962 = vadd.f32 %v961, %v948
        %v963 = vrot.slane %v962, 4
        %v964 = vadd.f32 %v962, %v963
        %v965 = vrot.slane %v964, 2
        %v966 = vadd.f32 %v964, %v965
        %v967 = vrot.slane %v966, 1
        %v968 = vadd.f32 %v966, %v967
        %v969 = vrcp.pop %v958
        %v970 = vmul.f32 %v930, %v969
        %v971 = vrcp.pop %v968
        %v972 = vmul.f32 %v932, %v971
        %v973 = vmul.f32 %v934, %v969
        %v974 = vmul.f32 %v936, %v971
        %v975 = vmul.f32 %v938, %v969
        %v976 = vmul.f32 %v940, %v971
        %v977 = vmul.f32 %v942, %v969
        %v978 = vmul.f32 %v944, %v971
        %v979 = vmul.f32 %v946, %v969
        %v980 = vmul.f32 %v948, %v971
        %981 = vxpose.xlu0.b32.start [1/16] %v625, 128
        %982 = vxpose.xlu0.b32.cont [2/16] %v626, 128
        %983 = vxpose.xlu0.b32.cont [3/16] %v627, 128
        %984 = vxpose.xlu0.b32.cont [4/16] %v628, 128
        %985 = vxpose.xlu0.b32.cont [5/16] %v629, 128
        %986 = vxpose.xlu0.b32.cont [6/16] %v630, 128
        %987 = vxpose.xlu0.b32.cont [7/16] %v631, 128
        %988 = vxpose.xlu0.b32.cont [8/16] %v632, 128
        %989 = vxpose.xlu0.b32.cont [9/16] 0.0, 128
        %990 = vxpose.xlu0.b32.cont [10/16] 0.0, 128
        %991 = vxpose.xlu0.b32.cont [11/16] 0.0, 128
        %992 = vxpose.xlu0.b32.cont [12/16] 0.0, 128
        %993 = vxpose.xlu0.b32.cont [13/16] 0.0, 128
        %994 = vxpose.xlu0.b32.cont [14/16] 0.0, 128
        %995 = vxpose.xlu0.b32.cont [15/16] 0.0, 128
        %996 = vxpose.xlu0.b32.end [16/16] 0.0, 128
        %v997 = vpop.trf.xlu0
        %v998 = vpop.trf.xlu0
        %v999 = vpop.trf.xlu0
        %v1000 = vpop.trf.xlu0
        %v1001 = vpop.trf.xlu0
        %v1002 = vpop.trf.xlu0
        %v1003 = vpop.trf.xlu0
        %v1004 = vpop.trf.xlu0
        %v1005 = vpop.trf.xlu0
        %v1006 = vpop.trf.xlu0
        %v1007 = vpop.trf.xlu0
        %v1008 = vpop.trf.xlu0
        %v1009 = vpop.trf.xlu0
        %v1010 = vpop.trf.xlu0
        %v1011 = vpop.trf.xlu0
        %v1012 = vpop.trf.xlu0
        %vm1013 = vcmask 523264
        %v1015 = vsel %vm1013, %v997, 0
        %v1018 = vsel %vm1013, %v998, 0
        %v1021 = vsel %vm1013, %v999, 0
        %1023 = vmatprep.subr.mxu0 %v852
        %1024 = vmatpush1.msra.mxu0 %v850
        %1025 = vmatprep.subr.mxu0 %v896
        %1026 = vmatpush1.msra.mxu0 %v894
        %1027 = vmatprep.subr.mxu0 %v898
        %1028 = vmatpush1.msra.mxu0 %v897
        %1029 = vmatprep.subr.mxu0 %v972
        %1030 = vmatpush1.msra.mxu0 %v970
        %1031 = vmatprep.subr.mxu0 %v974
        %1032 = vmatpush1.msra.mxu0 %v973
        %1033 = vmatprep.subr.mxu0 %v976
        %1034 = vmatpush1.msra.mxu0 %v975
        %1035 = vmatprep.subr.mxu0 %v978
        %1036 = vmatpush1.msra.mxu0 %v977
        %1037 = vmatprep.subr.mxu0 %v980
        %1038 = vmatpush1.msra.mxu0 %v979
        %1039 = vmatprep.subr.mxu0 0.0
        %1040 = vmatpush1.msra.mxu0 0.0
        %1041 = vmatprep.subr.mxu0 0.0
        %1042 = vmatpush1.msra.mxu0 0.0
        %1043 = vmatprep.subr.mxu0 0.0
        %1044 = vmatpush1.msra.mxu0 0.0
        %1045 = vmatprep.subr.mxu0 0.0
        %1046 = vmatpush1.msra.mxu0 0.0
        %1047 = vmatprep.subr.mxu0 0.0
        %1048 = vmatpush1.msra.mxu0 0.0
        %1049 = vmatprep.subr.mxu0 0.0
        %1050 = vmatpush1.msra.mxu0 0.0
        %1051 = vmatprep.subr.mxu0 0.0
        %1052 = vmatpush1.msra.mxu0 0.0
        %1053 = vmatprep.subr.mxu0 0.0
        %1054 = vmatpush1.msra.mxu0 0.0
        %1055 = vmatprep.subr.mxu0 0.0
        %1056 = vmatpush1.msra.mxu0 0.0
        %1057 = vmatprep.subr.mxu0 0.0
        %1058 = vmatpush1.msra.mxu0 0.0
        %1059 = vmatprep.subr.mxu0 0.0
        %1060 = vmatpush1.msra.mxu0 0.0
        %1061 = vmatprep.subr.mxu0 0.0
        %1062 = vmatpush1.msra.mxu0 0.0
        %1063 = vmatprep.subr.mxu0 0.0
        %1064 = vmatpush1.msra.mxu0 0.0
        %1065 = vmatprep.subr.mxu0 0.0
        %1066 = vmatpush1.msra.mxu0 0.0
        %1067 = vmatprep.subr.mxu0 0.0
        %1068 = vmatpush1.msra.mxu0 0.0
        %1069 = vmatprep.subr.mxu0 0.0
        %1070 = vmatpush1.msra.mxu0 0.0
        %1071 = vmatprep.subr.mxu0 0.0
        %1072 = vmatpush1.msra.mxu0 0.0
        %1073 = vmatprep.subr.mxu0 0.0
        %1074 = vmatpush1.msra.mxu0 0.0
        %1075 = vmatprep.subr.mxu0 0.0
        %1076 = vmatpush1.msra.mxu0 0.0
        %1077 = vmatprep.subr.mxu0 0.0
        %1078 = vmatpush1.msra.mxu0 0.0
        %1079 = vmatprep.subr.mxu0 0.0
        %1080 = vmatpush1.msra.mxu0 0.0
        %1081 = vmatprep.subr.mxu0 0.0
        %1082 = vmatpush1.msra.mxu0 0.0
        %1083 = vmatprep.subr.mxu0 0.0
        %1084 = vmatpush1.msra.mxu0 0.0
        %1085 = vmatprep.subr.mxu0 0.0
        %1086 = vmatpush1.msra.mxu0 0.0
        %1087 = vmatprep.mubr.f32.mxu0 0.0
        %1088 = vmatmul.mubr.f32.gmra.mrb[0].mxu0 %v1015
        %v1089 = vpop.f32.mrb[0].mxu0
        %v1090 = vadd.f32 %v611, %v1089
        %v1091 = vpop.f32.mrb[0].mxu0
        %v1092 = vadd.f32 %v612, %v1091
        %1093 = vmatprep.mubr.f32.mxu0 0.0
        %1094 = vmatmul.mubr.f32.gmra.mrb[0].mxu0 %v1018
        %v1095 = vpop.f32.mrb[0].mxu0
        %v1096 = vadd.f32 %v613, %v1095
        %v1097 = vpop.f32.mrb[0].mxu0
        %v1098 = vadd.f32 %v614, %v1097
        %1099 = vmatprep.mubr.f32.mxu0 0.0
        %1100 = vmatmul.mubr.f32.gmra.mrb[0].mxu0 %v1021
        %v1101 = vpop.f32.mrb[0].mxu0
        %v1102 = vadd.f32 %v615, %v1101
        %v1103 = vpop.f32.mrb[0].mxu0
        %v1104 = vadd.f32 %v616, %v1103
        %1105 = vdwg.mxu0
        %v1106 = vpack.c.bf16 %v1090, %v623
        %v1107 = vpack.c.bf16 %v1092, %v624
        %v1108 = vpack.c.bf16 %v1102, %v1096
        %v1109 = vpack.c.bf16 %v1104, %v1098
        %v1114 = vunpack.c.l.b16 %v1106
        %v1115 = vunpack.c.l.b16 %v1107
        %v1116 = vunpack.c.h.b16 %v1106
        %v1117 = vunpack.c.h.b16 %v1107
        %v1118 = vunpack.c.l.b16 %v1108
        %v1119 = vunpack.c.l.b16 %v1109
        %v1120 = vunpack.c.h.b16 %v1108
        %v1121 = vunpack.c.h.b16 %v1109
        %v1122 = vpack.c.b16 %v1115, %v1114
        %v1123 = vpack.c.b16 %v1117, %v1116
        %v1124 = vpack.c.b16 %v1119, %v1118
        %v1125 = vpack.c.b16 %v1121, %v1120
        %1130 = vst [vmem:[%s443] sm:$0xff] %v1122
        %1131 = vst [vmem:[%s443 + $0x8] sm:$0xff] %v1123
        %1132 = vst [vmem:[%s443 + $0x10] sm:$0xff] %v1124
        %1133 = vst [vmem:[%s443 + $0x18] sm:$0xff] %v1125
        %s1134 = sand.u32 %s212, 1
        %s1135 = scalar_lea.sflag [#allocation4], %s1134
        %s1136 = sand.u32 %s212, 1
        %s1137 = smul.addr %s1136, 32
        %s1138 = scalar_lea.vmem [#allocation13], %s1137
        // Predicated region
        $region77: #{psp2_head.2} parent=47 // pred_check
          %p1139 = pneg %p222
        $region78: #{psp2_head.2} parent=47 // pred_check_branch
          %1141 = sbr.rel (%p1139) target = $region80
        $region79: #{psp2_head.2} parent=47 // pred_region
          %s1142 = smul.u32 2, %s31
          %s1144 = ssub.s32 512, 512
          %1145 = vsyncadd %s1135, %s1144
          %s1146 = smul.addr %s30, 8
          %s1147 = sadd.s32 %s1142, %s1146
          %s1148 = smul.addr %s1147, 64
          %s1149 = scalar_lea.hbm %s7, %s1148
          %s1150 = sshll.u32 %s1138, 4
          %s1151 = int_to_ptr.vmem [resolvable:$true] %s1150
          %1156 = dma.vmem_to_hbm [thread:$0]  %s1151, 512, %s1149, %s1135, 128, 128, 8
        $region80: #{psp2_head.2} parent=47 // pred_fallthru
          _
      $region48: #{psp2_head.2} parent=5 // pred_fallthru
        _
      %p1157 = scmp.le.s32.totalorder 2, %s21
      // Predicated region
      $region81: #{psp2_head.2} parent=5 // pred_check
        %p1158 = pneg %p1157
      $region82: #{psp2_head.2} parent=5 // pred_check_branch
        %1160 = sbr.rel (%p1158) target = $region84
      $region83: #{psp2_head.2} parent=5 // pred_region
        %s1161 = ssub.s32 %s21, 2
        // Predicated region
        $region85: #{psp2_head.2} parent=83 // pred_check
          %p1162 = pneg %p228
        $region86: #{psp2_head.2} parent=83 // pred_check_branch
          %1164 = sbr.rel (%p1162) target = $region88
        $region87: #{psp2_head.2} parent=83 // pred_region
          %s1165 = sand.u32 %s213, 1
          %s1166 = scalar_lea.sflag [#allocation4], %s1165
          %s1167 = sand.u32 %s213, 1
          %s1168 = smul.addr %s1167, 32
          %s1169 = scalar_lea.vmem [#allocation13], %s1168
          %1170 = dma.done %s1166, 512
        $region88: #{psp2_head.2} parent=83 // pred_fallthru
          _
      $region84: #{psp2_head.2} parent=5 // pred_fallthru
        _
    $region6: #{psp2_head.2} parent=1 // loop_footer
      %s25 = sadd.s32 1, %s21
    $region7: #{psp2_head.2} parent=1 // loop_footer_branch
      %20 = sbr.rel target = $region3
    $region8: #{psp2_head.2} parent=1 // loop_exit
      _
    %1171 = vsyncpa [#allocation3], 1
    %s1172 = scalar_lea.sflag [#allocation3], 1
    %1173 = vsyncpa %s1172, 1
    %1174 = vsyncpa [#allocation6], 1
    %1175 = vsyncpa [#allocation9], 1
    %1176 = vsyncpa [#allocation4], 1
    %s1177 = scalar_lea.sflag [#allocation4], 1
    %1178 = vsyncpa %s1177, 1

// kernel: psp2_head.3
$region0: #{psp2_head.3}
  #allocation0 [shape = 'u32[]', space=smem, size = 0x4, offset = 0x4, fixed_abs, tag = 'smem constant byte address 0x4 - core index']
  #allocation1 [shape = 'u32[144,128]{1,0:T(1,128)}', space=vmem, size = 0x12000, scoped, tag = 'internal scratch']
  %s0 = inlined_call_operand.hbm [shape: bf16[2,32,256], index: 0, kind: input, shape index: {}]
  %s1 = inlined_call_operand.hbm [shape: bf16[2,32,256], index: 1, kind: input, shape index: {}]
  %s2 = inlined_call_operand.hbm [shape: bf16[9,8,64], index: 2, kind: input, shape index: {}]
  %s3 = inlined_call_operand.hbm [shape: f32[8,1], index: 3, kind: input, shape index: {}]
  %s4 = inlined_call_operand.hbm [shape: f32[8,1], index: 4, kind: input, shape index: {}]
  %s5 = inlined_call_operand.hbm [shape: f32[8,8], index: 5, kind: input, shape index: {}]
  %s6 = inlined_call_operand.hbm [shape: f32[8,1], index: 6, kind: input, shape index: {}]
  %s7 = inlined_call_operand.hbm [shape: f32[2,256], index: 7, kind: input, shape index: {}]
  %s8 = inlined_call_operand.hbm [shape: f32[2,8,256], index: 8, kind: output, shape index: {}]
  %s9 = sld [smem:[#allocation0]]
  $region97: #{psp2_head.3} parent=0
    _
  %s11 = ssub.s32 1, %s9
  %s12 = scalar_select 0, %s11, %s9
  $region1: #{psp2_head.3} parent=0
    #allocation2 [shape = 'u8[32768]{0}', space=vmem, size = 0x8000, scoped, tag = 'input window, operand 0']
    #allocation3 [shape = 's32[2]{0}', space=sflag, size = 0x8, scoped, tag = 'scoped memory for psp2_head.3']
    #allocation4 [shape = 's32[2]{0}', space=sflag, size = 0x8, scoped, tag = 'scoped memory for psp2_head.3']
    #allocation5 [shape = 'u8[32768]{0}', space=vmem, size = 0x8000, scoped, tag = 'input window, operand 1']
    #allocation6 [shape = 's32[2]{0}', space=sflag, size = 0x8, scoped, tag = 'scoped memory for psp2_head.3']
    #allocation7 [shape = 'u8[18432]{0}', space=vmem, size = 0x4800, scoped, tag = 'input window, operand 2, single buffered']
    #allocation8 [shape = 'u8[4096]{0}', space=vmem, size = 0x1000, scoped, tag = 'input window, operand 3, single buffered']
    #allocation9 [shape = 's32[1]{0}', space=sflag, size = 0x4, scoped, tag = 'scoped memory for psp2_head.3']
    #allocation10 [shape = 'u8[4096]{0}', space=vmem, size = 0x1000, scoped, tag = 'input window, operand 4, single buffered']
    #allocation11 [shape = 'u8[4096]{0}', space=vmem, size = 0x1000, scoped, tag = 'input window, operand 5, single buffered']
    #allocation12 [shape = 's32[1]{0}', space=sflag, size = 0x4, scoped, tag = 'scoped memory for psp2_head.3']
    #allocation13 [shape = 'u8[4096]{0}', space=vmem, size = 0x1000, scoped, tag = 'input window, operand 6, single buffered']
    #allocation14 [shape = 'u8[2048]{0}', space=vmem, size = 0x800, scoped, tag = 'input window, operand 7, single buffered']
    #allocation15 [shape = 's32[1]{0}', space=sflag, size = 0x4, scoped, tag = 'scoped memory for psp2_head.3']
    #allocation16 [shape = 'u8[16384]{0}', space=vmem, size = 0x4000, scoped, tag = 'output window, operand 0']
    %13 = vsyncpa [#allocation3], 0
    %s14 = scalar_lea.sflag [#allocation3], 1
    %15 = vsyncpa %s14, 0
    %16 = vsyncpa [#allocation6], 0
    %s17 = scalar_lea.sflag [#allocation6], 1
    %18 = vsyncpa %s17, 0
    %19 = vsyncpa [#allocation9], 0
    %20 = vsyncpa [#allocation12], 0
    %21 = vsyncpa [#allocation15], 0
    %22 = vsyncpa [#allocation4], 0
    %s23 = scalar_lea.sflag [#allocation4], 1
    %24 = vsyncpa %s23, 0
    loop: start=0, step=1, limit=4
    $region2: #{psp2_head.3} parent=1 // loop_pre_header
      _
    $region3: #{psp2_head.3} parent=1 // loop_header
      %s26 = sphi 0, %s30
      %p27 = scmp.ge.s32.totalorder %s26, 4
      %s36 = sphi 0, %s38
      %s39 = sphi 0, %s36
      %s40 = sphi 0, %s39
      %s56 = sphi 0, %s40
      %s62 = sphi 0, %s64
      %s65 = sphi 0, %s62
      %s66 = sphi 0, %s65
      %s82 = sphi 0, %s66
      %s86 = sphi 0, %s86
      %s88 = sphi 0, %s86
      %s89 = sphi 0, %s88
      %s103 = sphi 0, %s89
      %s107 = sphi 0, %s107
      %s109 = sphi 0, %s107
      %s110 = sphi 0, %s109
      %s124 = sphi 0, %s110
      %s128 = sphi 0, %s128
      %s130 = sphi 0, %s128
      %s131 = sphi 0, %s130
      %s145 = sphi 0, %s131
      %s149 = sphi 0, %s149
      %s151 = sphi 0, %s149
      %s152 = sphi 0, %s151
      %s166 = sphi 0, %s152
      %s170 = sphi 0, %s170
      %s172 = sphi 0, %s170
      %s173 = sphi 0, %s172
      %s187 = sphi 0, %s173
      %s191 = sphi 0, %s191
      %s193 = sphi 0, %s191
      %s194 = sphi 0, %s193
      %s208 = sphi 0, %s194
      %s214 = sphi 0, %s216
      %s217 = sphi 0, %s214
      %s218 = sphi 0, %s217
      %s234 = sphi 0, %s218
    $region4: #{psp2_head.3} parent=1 // loop_header_branch
      %29 = sbr.rel (%p27) target = $region8
    $region5: #{psp2_head.3} parent=1 // loop_body
      %s31 = ssub.s32 %s26, 1
      %s32 = ssub.s32 %s26, 2
      %s33 = sadd.s32 %s26, 1
      %s34 = ssub.s32 %s26, %s33
      %p35 = scmp.eq.s32.totalorder %s34, 0
      %s37 = sadd.s32 %s36, 1
      %s38 = scalar_select %p35, %s36, %s37
      %p41 = pneg %p35
      %p42 = scmp.eq.s32.totalorder %s26, 1
      %p43 = por %p41, %p42
      %p44 = scmp.ne.s32.totalorder %s36, %s39
      %p45 = scmp.eq.s32.totalorder %s26, 0
      %p46 = por %p44, %p45
      %p47 = scmp.ne.s32.totalorder %s36, %s39
      %p48 = scmp.eq.s32.totalorder %s31, 1
      %p49 = por %p47, %p48
      %p50 = scmp.ne.s32.totalorder %s39, %s40
      %p51 = scmp.eq.s32.totalorder %s31, 0
      %p52 = por %p50, %p51
      %p53 = scmp.ne.s32.totalorder %s39, %s40
      %p54 = scmp.eq.s32.totalorder %s32, 1
      %p55 = por %p53, %p54
      %p57 = scmp.ne.s32.totalorder %s40, %s56
      %p58 = scmp.eq.s32.totalorder %s32, 0
      %p59 = por %p57, %p58
      %s60 = ssub.s32 %s26, %s33
      %p61 = scmp.eq.s32.totalorder %s60, 0
      %s63 = sadd.s32 %s62, 1
      %s64 = scalar_select %p61, %s62, %s63
      %p67 = pneg %p61
      %p68 = scmp.eq.s32.totalorder %s26, 1
      %p69 = por %p67, %p68
      %p70 = scmp.ne.s32.totalorder %s62, %s65
      %p71 = scmp.eq.s32.totalorder %s26, 0
      %p72 = por %p70, %p71
      %p73 = scmp.ne.s32.totalorder %s62, %s65
      %p74 = scmp.eq.s32.totalorder %s31, 1
      %p75 = por %p73, %p74
      %p76 = scmp.ne.s32.totalorder %s65, %s66
      %p77 = scmp.eq.s32.totalorder %s31, 0
      %p78 = por %p76, %p77
      %p79 = scmp.ne.s32.totalorder %s65, %s66
      %p80 = scmp.eq.s32.totalorder %s32, 1
      %p81 = por %p79, %p80
      %p83 = scmp.ne.s32.totalorder %s66, %s82
      %p84 = scmp.eq.s32.totalorder %s32, 0
      %p85 = por %p83, %p84
      %s87 = sadd.s32 %s86, 1
      %p90 = scmp.eq.s32.totalorder %s26, 1
      %p91 = scmp.ne.s32.totalorder %s86, %s88
      %p92 = scmp.eq.s32.totalorder %s26, 0
      %p93 = por %p91, %p92
      %p94 = scmp.ne.s32.totalorder %s86, %s88
      %p95 = scmp.eq.s32.totalorder %s31, 1
      %p96 = por %p94, %p95
      %p97 = scmp.ne.s32.totalorder %s88, %s89
      %p98 = scmp.eq.s32.totalorder %s31, 0
      %p99 = por %p97, %p98
      %p100 = scmp.ne.s32.totalorder %s88, %s89
      %p101 = scmp.eq.s32.totalorder %s32, 1
      %p102 = por %p100, %p101
      %p104 = scmp.ne.s32.totalorder %s89, %s103
      %p105 = scmp.eq.s32.totalorder %s32, 0
      %p106 = por %p104, %p105
      %s108 = sadd.s32 %s107, 1
      %p111 = scmp.eq.s32.totalorder %s26, 1
      %p112 = scmp.ne.s32.totalorder %s107, %s109
      %p113 = scmp.eq.s32.totalorder %s26, 0
      %p114 = por %p112, %p113
      %p115 = scmp.ne.s32.totalorder %s107, %s109
      %p116 = scmp.eq.s32.totalorder %s31, 1
      %p117 = por %p115, %p116
      %p118 = scmp.ne.s32.totalorder %s109, %s110
      %p119 = scmp.eq.s32.totalorder %s31, 0
      %p120 = por %p118, %p119
      %p121 = scmp.ne.s32.totalorder %s109, %s110
      %p122 = scmp.eq.s32.totalorder %s32, 1
      %p123 = por %p121, %p122
      %p125 = scmp.ne.s32.totalorder %s110, %s124
      %p126 = scmp.eq.s32.totalorder %s32, 0
      %p127 = por %p125, %p126
      %s129 = sadd.s32 %s128, 1
      %p132 = scmp.eq.s32.totalorder %s26, 1
      %p133 = scmp.ne.s32.totalorder %s128, %s130
      %p134 = scmp.eq.s32.totalorder %s26, 0
      %p135 = por %p133, %p134
      %p136 = scmp.ne.s32.totalorder %s128, %s130
      %p137 = scmp.eq.s32.totalorder %s31, 1
      %p138 = por %p136, %p137
      %p139 = scmp.ne.s32.totalorder %s130, %s131
      %p140 = scmp.eq.s32.totalorder %s31, 0
      %p141 = por %p139, %p140
      %p142 = scmp.ne.s32.totalorder %s130, %s131
      %p143 = scmp.eq.s32.totalorder %s32, 1
      %p144 = por %p142, %p143
      %p146 = scmp.ne.s32.totalorder %s131, %s145
      %p147 = scmp.eq.s32.totalorder %s32, 0
      %p148 = por %p146, %p147
      %s150 = sadd.s32 %s149, 1
      %p153 = scmp.eq.s32.totalorder %s26, 1
      %p154 = scmp.ne.s32.totalorder %s149, %s151
      %p155 = scmp.eq.s32.totalorder %s26, 0
      %p156 = por %p154, %p155
      %p157 = scmp.ne.s32.totalorder %s149, %s151
      %p158 = scmp.eq.s32.totalorder %s31, 1
      %p159 = por %p157, %p158
      %p160 = scmp.ne.s32.totalorder %s151, %s152
      %p161 = scmp.eq.s32.totalorder %s31, 0
      %p162 = por %p160, %p161
      %p163 = scmp.ne.s32.totalorder %s151, %s152
      %p164 = scmp.eq.s32.totalorder %s32, 1
      %p165 = por %p163, %p164
      %p167 = scmp.ne.s32.totalorder %s152, %s166
      %p168 = scmp.eq.s32.totalorder %s32, 0
      %p169 = por %p167, %p168
      %s171 = sadd.s32 %s170, 1
      %p174 = scmp.eq.s32.totalorder %s26, 1
      %p175 = scmp.ne.s32.totalorder %s170, %s172
      %p176 = scmp.eq.s32.totalorder %s26, 0
      %p177 = por %p175, %p176
      %p178 = scmp.ne.s32.totalorder %s170, %s172
      %p179 = scmp.eq.s32.totalorder %s31, 1
      %p180 = por %p178, %p179
      %p181 = scmp.ne.s32.totalorder %s172, %s173
      %p182 = scmp.eq.s32.totalorder %s31, 0
      %p183 = por %p181, %p182
      %p184 = scmp.ne.s32.totalorder %s172, %s173
      %p185 = scmp.eq.s32.totalorder %s32, 1
      %p186 = por %p184, %p185
      %p188 = scmp.ne.s32.totalorder %s173, %s187
      %p189 = scmp.eq.s32.totalorder %s32, 0
      %p190 = por %p188, %p189
      %s192 = sadd.s32 %s191, 1
      %p195 = scmp.eq.s32.totalorder %s26, 1
      %p196 = scmp.ne.s32.totalorder %s191, %s193
      %p197 = scmp.eq.s32.totalorder %s26, 0
      %p198 = por %p196, %p197
      %p199 = scmp.ne.s32.totalorder %s191, %s193
      %p200 = scmp.eq.s32.totalorder %s31, 1
      %p201 = por %p199, %p200
      %p202 = scmp.ne.s32.totalorder %s193, %s194
      %p203 = scmp.eq.s32.totalorder %s31, 0
      %p204 = por %p202, %p203
      %p205 = scmp.ne.s32.totalorder %s193, %s194
      %p206 = scmp.eq.s32.totalorder %s32, 1
      %p207 = por %p205, %p206
      %p209 = scmp.ne.s32.totalorder %s194, %s208
      %p210 = scmp.eq.s32.totalorder %s32, 0
      %p211 = por %p209, %p210
      %s212 = ssub.s32 %s26, %s33
      %p213 = scmp.eq.s32.totalorder %s212, 0
      %s215 = sadd.s32 %s214, 1
      %s216 = scalar_select %p213, %s214, %s215
      %p219 = pneg %p213
      %p220 = scmp.eq.s32.totalorder %s26, 1
      %p221 = por %p219, %p220
      %p222 = scmp.ne.s32.totalorder %s214, %s217
      %p223 = scmp.eq.s32.totalorder %s26, 0
      %p224 = por %p222, %p223
      %p225 = scmp.ne.s32.totalorder %s214, %s217
      %p226 = scmp.eq.s32.totalorder %s31, 1
      %p227 = por %p225, %p226
      %p228 = scmp.ne.s32.totalorder %s217, %s218
      %p229 = scmp.eq.s32.totalorder %s31, 0
      %p230 = por %p228, %p229
      %p231 = scmp.ne.s32.totalorder %s217, %s218
      %p232 = scmp.eq.s32.totalorder %s32, 1
      %p233 = por %p231, %p232
      %p235 = scmp.ne.s32.totalorder %s218, %s234
      %p236 = scmp.eq.s32.totalorder %s32, 0
      %p237 = por %p235, %p236
      %p238 = scmp.le.s32.totalorder 1, %s26
      %p239 = scmp.lt.s32.totalorder %s26, 3
      %p240 = pnand %p238, %p239
      %p241 = pneg %p240
      // Predicated region
      $region9: #{psp2_head.3} parent=5 // pred_check
        _
      $region10: #{psp2_head.3} parent=5 // pred_check_branch
        %243 = sbr.rel (%p240) target = $region12
      $region11: #{psp2_head.3} parent=5 // pred_region
        %s244 = ssub.s32 %s26, 1
        // Predicated region
        $region13: #{psp2_head.3} parent=11 // pred_check
          %p245 = pneg %p99
        $region14: #{psp2_head.3} parent=11 // pred_check_branch
          %247 = sbr.rel (%p245) target = $region16
        $region15: #{psp2_head.3} parent=11 // pred_region
          %s249 = ssub.s32 576, 576
          %250 = vsyncadd [#allocation6], %s249
          %s251 = sshll.u32 [#allocation7], 4
          %s252 = int_to_ptr.vmem [resolvable:$true] %s251
          %257 = dma.hbm_to_vmem [thread:$0]  %s2, 576, %s252, [#allocation6], 64, 64, 4
        $region16: #{psp2_head.3} parent=11 // pred_fallthru
          _
        // Predicated region
        $region17: #{psp2_head.3} parent=11 // pred_check
          %p258 = pneg %p120
        $region18: #{psp2_head.3} parent=11 // pred_check_branch
          %260 = sbr.rel (%p258) target = $region20
        $region19: #{psp2_head.3} parent=11 // pred_region
          %s262 = ssub.s32 128, 128
          %263 = vsyncadd [#allocation9], %s262
          %s265 = sshll.u32 [#allocation8], 4
          %s266 = int_to_ptr.vmem [resolvable:$true] %s265
          %268 = dma.hbm_to_vmem [thread:$0]  %s3, 128, %s266, [#allocation9]
        $region20: #{psp2_head.3} parent=11 // pred_fallthru
          _
        // Predicated region
        $region21: #{psp2_head.3} parent=11 // pred_check
          %p269 = pneg %p141
        $region22: #{psp2_head.3} parent=11 // pred_check_branch
          %271 = sbr.rel (%p269) target = $region24
        $region23: #{psp2_head.3} parent=11 // pred_region
          %s273 = ssub.s32 128, 128
          %274 = vsyncadd [#allocation9], %s273
          %s276 = sshll.u32 [#allocation10], 4
          %s277 = int_to_ptr.vmem [resolvable:$true] %s276
          %279 = dma.hbm_to_vmem [thread:$0]  %s4, 128, %s277, [#allocation9]
        $region24: #{psp2_head.3} parent=11 // pred_fallthru
          _
        // Predicated region
        $region25: #{psp2_head.3} parent=11 // pred_check
          %p280 = pneg %p162
        $region26: #{psp2_head.3} parent=11 // pred_check_branch
          %282 = sbr.rel (%p280) target = $region28
        $region27: #{psp2_head.3} parent=11 // pred_region
          %s284 = ssub.s32 128, 128
          %285 = vsyncadd [#allocation12], %s284
          %s287 = sshll.u32 [#allocation11], 4
          %s288 = int_to_ptr.vmem [resolvable:$true] %s287
          %290 = dma.hbm_to_vmem [thread:$0]  %s5, 128, %s288, [#allocation12]
        $region28: #{psp2_head.3} parent=11 // pred_fallthru
          _
        // Predicated region
        $region29: #{psp2_head.3} parent=11 // pred_check
          %p291 = pneg %p183
        $region30: #{psp2_head.3} parent=11 // pred_check_branch
          %293 = sbr.rel (%p291) target = $region32
        $region31: #{psp2_head.3} parent=11 // pred_region
          %s295 = ssub.s32 128, 128
          %296 = vsyncadd [#allocation12], %s295
          %s298 = sshll.u32 [#allocation13], 4
          %s299 = int_to_ptr.vmem [resolvable:$true] %s298
          %301 = dma.hbm_to_vmem [thread:$0]  %s6, 128, %s299, [#allocation12]
        $region32: #{psp2_head.3} parent=11 // pred_fallthru
          _
        // Predicated region
        $region33: #{psp2_head.3} parent=11 // pred_check
          %p302 = pneg %p204
        $region34: #{psp2_head.3} parent=11 // pred_check_branch
          %304 = sbr.rel (%p302) target = $region36
        $region35: #{psp2_head.3} parent=11 // pred_region
          %s306 = ssub.s32 64, 64
          %307 = vsyncadd [#allocation15], %s306
          %s309 = sshll.u32 [#allocation14], 4
          %s310 = int_to_ptr.vmem [resolvable:$true] %s309
          %312 = dma.hbm_to_vmem [thread:$0]  %s7, 64, %s310, [#allocation15]
        $region36: #{psp2_head.3} parent=11 // pred_fallthru
          _
      $region12: #{psp2_head.3} parent=5 // pred_fallthru
        _
      %p313 = scmp.lt.s32.totalorder %s26, 2
      // Predicated region
      $region37: #{psp2_head.3} parent=5 // pred_check
        %p314 = pneg %p313
      $region38: #{psp2_head.3} parent=5 // pred_check_branch
        %316 = sbr.rel (%p314) target = $region40
      $region39: #{psp2_head.3} parent=5 // pred_region
        // Predicated region
        $region41: #{psp2_head.3} parent=39 // pred_check
          %p317 = pneg %p46
        $region42: #{psp2_head.3} parent=39 // pred_check_branch
          %319 = sbr.rel (%p317) target = $region44
        $region43: #{psp2_head.3} parent=39 // pred_region
          %s320 = sand.u32 %s36, 1
          %s321 = scalar_lea.sflag [#allocation3], %s320
          %s322 = sand.u32 %s36, 1
          %s323 = smul.addr %s322, 32
          %s324 = scalar_lea.vmem [#allocation2], %s323
          %s326 = ssub.s32 512, 512
          %327 = vsyncadd %s321, %s326
          %s328 = smul.addr %s26, 8
          %s329 = smul.addr %s328, 64
          %s330 = scalar_lea.hbm %s0, %s329
          %s331 = sshll.u32 %s324, 4
          %s332 = int_to_ptr.vmem [resolvable:$true] %s331
          %337 = dma.hbm_to_vmem [thread:$0]  %s330, 512, %s332, %s321, 128, 128, 8
        $region44: #{psp2_head.3} parent=39 // pred_fallthru
          _
        // Predicated region
        $region45: #{psp2_head.3} parent=39 // pred_check
          %p338 = pneg %p72
        $region46: #{psp2_head.3} parent=39 // pred_check_branch
          %340 = sbr.rel (%p338) target = $region48
        $region47: #{psp2_head.3} parent=39 // pred_region
          %s341 = sand.u32 %s26, 1
          %s342 = scalar_lea.sflag [#allocation6], %s341
          %s343 = sand.u32 %s62, 1
          %s344 = smul.addr %s343, 32
          %s345 = scalar_lea.vmem [#allocation5], %s344
          %s347 = ssub.s32 512, 512
          %348 = vsyncadd %s342, %s347
          %s349 = smul.addr %s26, 8
          %s350 = smul.addr %s349, 64
          %s351 = scalar_lea.hbm %s1, %s350
          %s352 = sshll.u32 %s345, 4
          %s353 = int_to_ptr.vmem [resolvable:$true] %s352
          %358 = dma.hbm_to_vmem [thread:$0]  %s351, 512, %s353, %s342, 128, 128, 8
        $region48: #{psp2_head.3} parent=39 // pred_fallthru
          _
      $region40: #{psp2_head.3} parent=5 // pred_fallthru
        _
      %p359 = scmp.le.s32.totalorder 1, %s26
      %p360 = scmp.lt.s32.totalorder %s26, 3
      %p361 = pnand %p359, %p360
      %p362 = pneg %p361
      // Predicated region
      $region49: #{psp2_head.3} parent=5 // pred_check
        _
      $region50: #{psp2_head.3} parent=5 // pred_check_branch
        %364 = sbr.rel (%p361) target = $region52
      $region51: #{psp2_head.3} parent=5 // pred_region
        %s365 = ssub.s32 %s26, 1
        %s366 = sand.u32 %s39, 1
        %s367 = scalar_lea.sflag [#allocation3], %s366
        %s368 = sand.u32 %s39, 1
        %s369 = smul.addr %s368, 32
        %s370 = scalar_lea.vmem [#allocation2], %s369
        // Predicated region
        $region53: #{psp2_head.3} parent=51 // pred_check
          %p371 = pneg %p52
        $region54: #{psp2_head.3} parent=51 // pred_check_branch
          %373 = sbr.rel (%p371) target = $region56
        $region55: #{psp2_head.3} parent=51 // pred_region
          %374 = dma.done %s367, 512
        $region56: #{psp2_head.3} parent=51 // pred_fallthru
          _
        %s375 = sand.u32 %s31, 1
        %s376 = scalar_lea.sflag [#allocation6], %s375
        %s377 = sand.u32 %s65, 1
        %s378 = smul.addr %s377, 32
        %s379 = scalar_lea.vmem [#allocation5], %s378
        // Predicated region
        $region57: #{psp2_head.3} parent=51 // pred_check
          %p380 = pneg %p78
        $region58: #{psp2_head.3} parent=51 // pred_check_branch
          %382 = sbr.rel (%p380) target = $region60
        $region59: #{psp2_head.3} parent=51 // pred_region
          %383 = dma.done %s376, 512
        $region60: #{psp2_head.3} parent=51 // pred_fallthru
          _
        // Predicated region
        $region61: #{psp2_head.3} parent=51 // pred_check
          %p384 = pneg %p99
        $region62: #{psp2_head.3} parent=51 // pred_check_branch
          %386 = sbr.rel (%p384) target = $region64
        $region63: #{psp2_head.3} parent=51 // pred_region
          %387 = dma.done [#allocation6], 576
        $region64: #{psp2_head.3} parent=51 // pred_fallthru
          _
        // Predicated region
        $region65: #{psp2_head.3} parent=51 // pred_check
          %p388 = pneg %p120
        $region66: #{psp2_head.3} parent=51 // pred_check_branch
          %390 = sbr.rel (%p388) target = $region68
        $region67: #{psp2_head.3} parent=51 // pred_region
          %391 = dma.done [#allocation9], 128
        $region68: #{psp2_head.3} parent=51 // pred_fallthru
          _
        // Predicated region
        $region69: #{psp2_head.3} parent=51 // pred_check
          %p392 = pneg %p141
        $region70: #{psp2_head.3} parent=51 // pred_check_branch
          %394 = sbr.rel (%p392) target = $region72
        $region71: #{psp2_head.3} parent=51 // pred_region
          %395 = dma.done [#allocation9], 128
        $region72: #{psp2_head.3} parent=51 // pred_fallthru
          _
        // Predicated region
        $region73: #{psp2_head.3} parent=51 // pred_check
          %p396 = pneg %p162
        $region74: #{psp2_head.3} parent=51 // pred_check_branch
          %398 = sbr.rel (%p396) target = $region76
        $region75: #{psp2_head.3} parent=51 // pred_region
          %399 = dma.done [#allocation12], 128
        $region76: #{psp2_head.3} parent=51 // pred_fallthru
          _
        // Predicated region
        $region77: #{psp2_head.3} parent=51 // pred_check
          %p400 = pneg %p183
        $region78: #{psp2_head.3} parent=51 // pred_check_branch
          %402 = sbr.rel (%p400) target = $region80
        $region79: #{psp2_head.3} parent=51 // pred_region
          %403 = dma.done [#allocation12], 128
        $region80: #{psp2_head.3} parent=51 // pred_fallthru
          _
        // Predicated region
        $region81: #{psp2_head.3} parent=51 // pred_check
          %p404 = pneg %p204
        $region82: #{psp2_head.3} parent=51 // pred_check_branch
          %406 = sbr.rel (%p404) target = $region84
        $region83: #{psp2_head.3} parent=51 // pred_region
          %407 = dma.done [#allocation15], 64
        $region84: #{psp2_head.3} parent=51 // pred_fallthru
          _
        %s408 = sand.u32 %s39, 1
        %s409 = scalar_lea.sflag [#allocation3], %s408
        %s410 = sand.u32 %s39, 1
        %s411 = smul.addr %s410, 32
        %s412 = scalar_lea.vmem [#allocation2], %s411
        %p413 = pneg %p52
        %p414 = pneg %p49
        %s415 = sand.u32 %s31, 1
        %s416 = scalar_lea.sflag [#allocation6], %s415
        %s417 = sand.u32 %s65, 1
        %s418 = smul.addr %s417, 32
        %s419 = scalar_lea.vmem [#allocation5], %s418
        %p420 = pneg %p78
        %p421 = pneg %p75
        %p422 = pneg %p99
        %p423 = pneg %p96
        %p424 = pneg %p120
        %p425 = pneg %p117
        %p426 = pneg %p141
        %p427 = pneg %p138
        %p428 = pneg %p162
        %p429 = pneg %p159
        %p430 = pneg %p183
        %p431 = pneg %p180
        %p432 = pneg %p204
        %p433 = pneg %p201
        %p434 = pneg %p230
        %p435 = pneg %p227
        %s436 = sand.u32 %s217, 1
        %s437 = scalar_lea.sflag [#allocation4], %s436
        %s438 = sand.u32 %s217, 1
        %s439 = smul.addr %s438, 16
        %s440 = scalar_lea.vmem [#allocation16], %s439
        %v442 = vld [vmem:[%s370] sm:$0xff]
        %v443 = vld [vmem:[%s370 + $0x8] sm:$0xff]
        %v444 = vld [vmem:[%s370 + $0x10] sm:$0xff]
        %v445 = vld [vmem:[%s370 + $0x18] sm:$0xff]
        %v446 = vld [vmem:[%s379] sm:$0xff]
        %v447 = vld [vmem:[%s379 + $0x8] sm:$0xff]
        %v448 = vld [vmem:[%s379 + $0x10] sm:$0xff]
        %v449 = vld [vmem:[%s379 + $0x18] sm:$0xff]
        %v454 = vunpack.c.l.b16 %v442
        %v455 = vunpack.c.h.b16 %v442
        %v456 = vunpack.c.l.b16 %v443
        %v457 = vunpack.c.h.b16 %v443
        %v458 = vunpack.c.l.b16 %v444
        %v459 = vunpack.c.h.b16 %v444
        %v460 = vunpack.c.l.b16 %v445
        %v461 = vunpack.c.h.b16 %v445
        %v462 = vpack.c.b16 %v456, %v454
        %v463 = vpack.c.b16 %v457, %v455
        %v464 = vpack.c.b16 %v460, %v458
        %v465 = vpack.c.b16 %v461, %v459
        %v470 = vunpack.c.l.b16 %v446
        %v471 = vunpack.c.h.b16 %v446
        %v472 = vunpack.c.l.b16 %v447
        %v473 = vunpack.c.h.b16 %v447
        %v474 = vunpack.c.l.b16 %v448
        %v475 = vunpack.c.h.b16 %v448
        %v476 = vunpack.c.l.b16 %v449
        %v477 = vunpack.c.h.b16 %v449
        %v478 = vpack.c.b16 %v472, %v470
        %v479 = vpack.c.b16 %v473, %v471
        %v480 = vpack.c.b16 %v476, %v474
        %v481 = vpack.c.b16 %v477, %v475
        %482 = vrot.lane.b32.xlu0 %v462, 17
        %v483 = vpop.permute.xlu0 %482
        %484 = vrot.lane.b32.xlu0 %v463, 17
        %v485 = vpop.permute.xlu0 %484
        %486 = vrot.lane.b32.xlu0 %v464, 17
        %v487 = vpop.permute.xlu0 %486
        %488 = vrot.lane.b32.xlu0 %v465, 17
        %v489 = vpop.permute.xlu0 %488
        %490 = vrot.lane.b32.xlu0 %v478, 17
        %v491 = vpop.permute.xlu0 %490
        %492 = vrot.lane.b32.xlu0 %v479, 17
        %v493 = vpop.permute.xlu0 %492
        %494 = vrot.lane.b32.xlu0 %v480, 17
        %v495 = vpop.permute.xlu0 %494
        %496 = vrot.lane.b32.xlu0 %v481, 17
        %v497 = vpop.permute.xlu0 %496
        %vm498 = vcmask 138240
        %v499 = vsel %vm498, %v483, %v485
        %v500 = vsel %vm498, %v487, %v489
        %v501 = vsel %vm498, %v491, %v493
        %v502 = vsel %vm498, %v495, %v497
        %vm507 = vcmask 138240
        %v510 = vsel %vm507, 0, %v483
        %v513 = vsel %vm507, 0, %v487
        %v516 = vsel %vm507, 0, %v491
        %v519 = vsel %vm507, 0, %v495
        %v522 = vsel %vm507, %v485, 0
        %v524 = vsel %vm507, %v489, 0
        %v526 = vsel %vm507, %v493, 0
        %v528 = vsel %vm507, %v497, 0
        %v529 = vld [vmem:[#allocation7] sm:$0xf]
        %vm530 = vcmask 523264
        %v532 = vsel %vm530, %v529, 0
        %534 = vmatprep.subr.bf16.mxu0 %v499
        %535 = vmatpush1.bf16.msra.mxu0 %v510
        %536 = vmatprep.subr.bf16.mxu0 %v500
        %537 = vmatpush1.bf16.msra.mxu0 %v513
        %538 = vmatprep.subr.bf16.mxu0 %v501
        %539 = vmatpush1.bf16.msra.mxu0 %v516
        %540 = vmatprep.subr.bf16.mxu0 %v502
        %541 = vmatpush1.bf16.msra.mxu0 %v519
        %542 = vmatprep.subr.bf16.mxu0 0
        %543 = vmatpush1.bf16.msra.mxu0 0
        %544 = vmatprep.subr.bf16.mxu0 0
        %545 = vmatpush1.bf16.msra.mxu0 0
        %546 = vmatprep.subr.bf16.mxu0 0
        %547 = vmatpush1.bf16.msra.mxu0 0
        %548 = vmatprep.subr.bf16.mxu0 0
        %549 = vmatpush1.bf16.msra.mxu0 0
        %550 = vmatprep.subr.bf16.mxu0 0
        %551 = vmatpush1.bf16.msra.mxu0 0
        %552 = vmatprep.subr.bf16.mxu0 0
        %553 = vmatpush1.bf16.msra.mxu0 0
        %554 = vmatprep.subr.bf16.mxu0 0
        %555 = vmatpush1.bf16.msra.mxu0 0
        %556 = vmatprep.subr.bf16.mxu0 0
        %557 = vmatpush1.bf16.msra.mxu0 0
        %558 = vmatprep.subr.bf16.mxu0 0
        %559 = vmatpush1.bf16.msra.mxu0 0
        %560 = vmatprep.subr.bf16.mxu0 0
        %561 = vmatpush1.bf16.msra.mxu0 0
        %562 = vmatprep.subr.bf16.mxu0 0
        %563 = vmatpush1.bf16.msra.mxu0 0
        %564 = vmatprep.subr.bf16.mxu0 0
        %565 = vmatpush1.bf16.msra.mxu0 0
        %566 = vmatprep.mubr.bf16.mxu0 0
        %567 = vmatmul.mubr.bf16.gmra.mrb[0].mxu0 %v532
        %v568 = vpop.f32.mrb[0].mxu0
        %v569 = vadd.f32 0.0, %v568
        %v570 = vpop.f32.mrb[0].mxu0
        %v571 = vadd.f32 0.0, %v570
        %v572 = vpop.f32.mrb[0].mxu0
        %v573 = vpop.f32.mrb[0].mxu0
        %574 = vdwg.mxu0
        %v575 = vld [vmem:[#allocation14] ss:$2 sm:$0x3]
        %v577 = vlaneseq
        %v578 = vshrl.u32 %v577, 7
        %v579 = vsub.s32 0, %v578
        %v580 = vrot.slane %v575, %v579
        %v581 = vlaneseq
        %v582 = vshrl.u32 %v581, 7
        %v583 = vsub.s32 1, %v582
        %v584 = vrot.slane %v575, %v583
        %v587 = vmul.f32 %v569, %v580
        %v588 = vmul.f32 %v571, %v584
        %s589 = scalar_lea.vmem [#allocation7], 4
        %v590 = vld [vmem:[%s589] sm:$0xf]
        %599 = vrot.lane.b32.xlu0 %v510, 127
        %v600 = vpop.permute.xlu0 %599
        %601 = vrot.lane.b32.xlu0 %v499, 127
        %v602 = vpop.permute.xlu0 %601
        %603 = vrot.lane.b32.xlu0 %v522, 127
        %v604 = vpop.permute.xlu0 %603
        %605 = vrot.lane.b32.xlu0 %v513, 127
        %v606 = vpop.permute.xlu0 %605
        %607 = vrot.lane.b32.xlu0 %v500, 127
        %v608 = vpop.permute.xlu0 %607
        %609 = vrot.lane.b32.xlu0 %v524, 127
        %v610 = vpop.permute.xlu0 %609
        %611 = vrot.lane.b32.xlu0 %v516, 127
        %v612 = vpop.permute.xlu0 %611
        %613 = vrot.lane.b32.xlu0 %v501, 127
        %v614 = vpop.permute.xlu0 %613
        %615 = vrot.lane.b32.xlu0 %v526, 127
        %v616 = vpop.permute.xlu0 %615
        %617 = vrot.lane.b32.xlu0 %v519, 127
        %v618 = vpop.permute.xlu0 %617
        %619 = vrot.lane.b32.xlu0 %v502, 127
        %v620 = vpop.permute.xlu0 %619
        %621 = vrot.lane.b32.xlu0 %v528, 127
        %v622 = vpop.permute.xlu0 %621
        %vm623 = vcmask 1039360
        %v624 = vsel %vm623, %v600, %v602
        %v625 = vsel %vm623, %v602, %v604
        %v626 = vsel %vm623, %v606, %v608
        %v627 = vsel %vm623, %v608, %v610
        %v628 = vsel %vm623, %v612, %v614
        %v629 = vsel %vm623, %v614, %v616
        %v630 = vsel %vm623, %v618, %v620
        %v631 = vsel %vm623, %v620, %v622
        %v641 = vsel %vm530, %v590, 0
        %643 = vmatprep.subr.bf16.mxu0 %v625
        %644 = vmatpush1.bf16.msra.mxu0 %v624
        %645 = vmatprep.subr.bf16.mxu0 %v627
        %646 = vmatpush1.bf16.msra.mxu0 %v626
        %647 = vmatprep.subr.bf16.mxu0 %v629
        %648 = vmatpush1.bf16.msra.mxu0 %v628
        %649 = vmatprep.subr.bf16.mxu0 %v631
        %650 = vmatpush1.bf16.msra.mxu0 %v630
        %651 = vmatprep.subr.bf16.mxu0 0
        %652 = vmatpush1.bf16.msra.mxu0 0
        %653 = vmatprep.subr.bf16.mxu0 0
        %654 = vmatpush1.bf16.msra.mxu0 0
        %655 = vmatprep.subr.bf16.mxu0 0
        %656 = vmatpush1.bf16.msra.mxu0 0
        %657 = vmatprep.subr.bf16.mxu0 0
        %658 = vmatpush1.bf16.msra.mxu0 0
        %659 = vmatprep.subr.bf16.mxu0 0
        %660 = vmatpush1.bf16.msra.mxu0 0
        %661 = vmatprep.subr.bf16.mxu0 0
        %662 = vmatpush1.bf16.msra.mxu0 0
        %663 = vmatprep.subr.bf16.mxu0 0
        %664 = vmatpush1.bf16.msra.mxu0 0
        %665 = vmatprep.subr.bf16.mxu0 0
        %666 = vmatpush1.bf16.msra.mxu0 0
        %667 = vmatprep.subr.bf16.mxu0 0
        %668 = vmatpush1.bf16.msra.mxu0 0
        %669 = vmatprep.subr.bf16.mxu0 0
        %670 = vmatpush1.bf16.msra.mxu0 0
        %671 = vmatprep.subr.bf16.mxu0 0
        %672 = vmatpush1.bf16.msra.mxu0 0
        %673 = vmatprep.subr.bf16.mxu0 0
        %674 = vmatpush1.bf16.msra.mxu0 0
        %675 = vmatprep.mubr.bf16.mxu0 0
        %676 = vmatmul.mubr.bf16.gmra.mrb[0].mxu0 %v641
        %v677 = vpop.f32.mrb[0].mxu0
        %v678 = vadd.f32 0.0, %v677
        %v679 = vpop.f32.mrb[0].mxu0
        %v680 = vadd.f32 0.0, %v679
        %v681 = vpop.f32.mrb[0].mxu0
        %v682 = vpop.f32.mrb[0].mxu0
        %683 = vdwg.mxu0
        %v684 = vadd.f32 %v587, %v678
        %v685 = vadd.f32 %v588, %v680
        %s686 = scalar_lea.vmem [#allocation7], 8
        %v687 = vld [vmem:[%s686] sm:$0xf]
        %688 = vrot.lane.b32.xlu0 %v510, 126
        %v689 = vpop.permute.xlu0 %688
        %690 = vrot.lane.b32.xlu0 %v499, 126
        %v691 = vpop.permute.xlu0 %690
        %692 = vrot.lane.b32.xlu0 %v522, 126
        %v693 = vpop.permute.xlu0 %692
        %694 = vrot.lane.b32.xlu0 %v513, 126
        %v695 = vpop.permute.xlu0 %694
        %696 = vrot.lane.b32.xlu0 %v500, 126
        %v697 = vpop.permute.xlu0 %696
        %698 = vrot.lane.b32.xlu0 %v524, 126
        %v699 = vpop.permute.xlu0 %698
        %700 = vrot.lane.b32.xlu0 %v516, 126
        %v701 = vpop.permute.xlu0 %700
        %702 = vrot.lane.b32.xlu0 %v501, 126
        %v703 = vpop.permute.xlu0 %702
        %704 = vrot.lane.b32.xlu0 %v526, 126
        %v705 = vpop.permute.xlu0 %704
        %706 = vrot.lane.b32.xlu0 %v519, 126
        %v707 = vpop.permute.xlu0 %706
        %708 = vrot.lane.b32.xlu0 %v502, 126
        %v709 = vpop.permute.xlu0 %708
        %710 = vrot.lane.b32.xlu0 %v528, 126
        %v711 = vpop.permute.xlu0 %710
        %vm712 = vcmask 1031168
        %v713 = vsel %vm712, %v689, %v691
        %v714 = vsel %vm712, %v691, %v693
        %v715 = vsel %vm712, %v695, %v697
        %v716 = vsel %vm712, %v697, %v699
        %v717 = vsel %vm712, %v701, %v703
        %v718 = vsel %vm712, %v703, %v705
        %v719 = vsel %vm712, %v707, %v709
        %v720 = vsel %vm712, %v709, %v711
        %v730 = vsel %vm530, %v687, 0
        %732 = vmatprep.subr.bf16.mxu0 %v714
        %733 = vmatpush1.bf16.msra.mxu0 %v713
        %734 = vmatprep.subr.bf16.mxu0 %v716
        %735 = vmatpush1.bf16.msra.mxu0 %v715
        %736 = vmatprep.subr.bf16.mxu0 %v718
        %737 = vmatpush1.bf16.msra.mxu0 %v717
        %738 = vmatprep.subr.bf16.mxu0 %v720
        %739 = vmatpush1.bf16.msra.mxu0 %v719
        %740 = vmatprep.subr.bf16.mxu0 0
        %741 = vmatpush1.bf16.msra.mxu0 0
        %742 = vmatprep.subr.bf16.mxu0 0
        %743 = vmatpush1.bf16.msra.mxu0 0
        %744 = vmatprep.subr.bf16.mxu0 0
        %745 = vmatpush1.bf16.msra.mxu0 0
        %746 = vmatprep.subr.bf16.mxu0 0
        %747 = vmatpush1.bf16.msra.mxu0 0
        %748 = vmatprep.subr.bf16.mxu0 0
        %749 = vmatpush1.bf16.msra.mxu0 0
        %750 = vmatprep.subr.bf16.mxu0 0
        %751 = vmatpush1.bf16.msra.mxu0 0
        %752 = vmatprep.subr.bf16.mxu0 0
        %753 = vmatpush1.bf16.msra.mxu0 0
        %754 = vmatprep.subr.bf16.mxu0 0
        %755 = vmatpush1.bf16.msra.mxu0 0
        %756 = vmatprep.subr.bf16.mxu0 0
        %757 = vmatpush1.bf16.msra.mxu0 0
        %758 = vmatprep.subr.bf16.mxu0 0
        %759 = vmatpush1.bf16.msra.mxu0 0
        %760 = vmatprep.subr.bf16.mxu0 0
        %761 = vmatpush1.bf16.msra.mxu0 0
        %762 = vmatprep.subr.bf16.mxu0 0
        %763 = vmatpush1.bf16.msra.mxu0 0
        %764 = vmatprep.mubr.bf16.mxu0 0
        %765 = vmatmul.mubr.bf16.gmra.mrb[0].mxu0 %v730
        %v766 = vpop.f32.mrb[0].mxu0
        %v767 = vadd.f32 0.0, %v766
        %v768 = vpop.f32.mrb[0].mxu0
        %v769 = vadd.f32 0.0, %v768
        %v770 = vpop.f32.mrb[0].mxu0
        %v771 = vpop.f32.mrb[0].mxu0
        %772 = vdwg.mxu0
        %s773 = scalar_lea.vmem [#allocation14], 1
        %v774 = vld [vmem:[%s773] ss:$2 sm:$0x3]
        %v776 = vlaneseq
        %v777 = vshrl.u32 %v776, 7
        %v778 = vsub.s32 0, %v777
        %v779 = vrot.slane %v774, %v778
        %v780 = vlaneseq
        %v781 = vshrl.u32 %v780, 7
        %v782 = vsub.s32 1, %v781
        %v783 = vrot.slane %v774, %v782
        %v786 = vmul.f32 %v767, %v779
        %v787 = vmul.f32 %v769, %v783
        %v788 = vadd.f32 %v684, %v786
        %v789 = vadd.f32 %v685, %v787
        %s790 = scalar_lea.vmem [#allocation7], 12
        %v791 = vld [vmem:[%s790] sm:$0xf]
        %792 = vrot.lane.b32.xlu0 %v510, 112
        %v793 = vpop.permute.xlu0 %792
        %794 = vrot.lane.b32.xlu0 %v499, 112
        %v795 = vpop.permute.xlu0 %794
        %796 = vrot.lane.b32.xlu0 %v522, 112
        %v797 = vpop.permute.xlu0 %796
        %798 = vrot.lane.b32.xlu0 %v513, 112
        %v799 = vpop.permute.xlu0 %798
        %800 = vrot.lane.b32.xlu0 %v500, 112
        %v801 = vpop.permute.xlu0 %800
        %802 = vrot.lane.b32.xlu0 %v524, 112
        %v803 = vpop.permute.xlu0 %802
        %804 = vrot.lane.b32.xlu0 %v516, 112
        %v805 = vpop.permute.xlu0 %804
        %806 = vrot.lane.b32.xlu0 %v501, 112
        %v807 = vpop.permute.xlu0 %806
        %808 = vrot.lane.b32.xlu0 %v526, 112
        %v809 = vpop.permute.xlu0 %808
        %810 = vrot.lane.b32.xlu0 %v519, 112
        %v811 = vpop.permute.xlu0 %810
        %812 = vrot.lane.b32.xlu0 %v502, 112
        %v813 = vpop.permute.xlu0 %812
        %814 = vrot.lane.b32.xlu0 %v528, 112
        %v815 = vpop.permute.xlu0 %814
        %vm816 = vcmask 916480
        %v817 = vsel %vm816, %v793, %v795
        %v818 = vsel %vm816, %v795, %v797
        %v819 = vsel %vm816, %v799, %v801
        %v820 = vsel %vm816, %v801, %v803
        %v821 = vsel %vm816, %v805, %v807
        %v822 = vsel %vm816, %v807, %v809
        %v823 = vsel %vm816, %v811, %v813
        %v824 = vsel %vm816, %v813, %v815
        %v834 = vsel %vm530, %v791, 0
        %836 = vmatprep.subr.bf16.mxu0 %v818
        %837 = vmatpush1.bf16.msra.mxu0 %v817
        %838 = vmatprep.subr.bf16.mxu0 %v820
        %839 = vmatpush1.bf16.msra.mxu0 %v819
        %840 = vmatprep.subr.bf16.mxu0 %v822
        %841 = vmatpush1.bf16.msra.mxu0 %v821
        %842 = vmatprep.subr.bf16.mxu0 %v824
        %843 = vmatpush1.bf16.msra.mxu0 %v823
        %844 = vmatprep.subr.bf16.mxu0 0
        %845 = vmatpush1.bf16.msra.mxu0 0
        %846 = vmatprep.subr.bf16.mxu0 0
        %847 = vmatpush1.bf16.msra.mxu0 0
        %848 = vmatprep.subr.bf16.mxu0 0
        %849 = vmatpush1.bf16.msra.mxu0 0
        %850 = vmatprep.subr.bf16.mxu0 0
        %851 = vmatpush1.bf16.msra.mxu0 0
        %852 = vmatprep.subr.bf16.mxu0 0
        %853 = vmatpush1.bf16.msra.mxu0 0
        %854 = vmatprep.subr.bf16.mxu0 0
        %855 = vmatpush1.bf16.msra.mxu0 0
        %856 = vmatprep.subr.bf16.mxu0 0
        %857 = vmatpush1.bf16.msra.mxu0 0
        %858 = vmatprep.subr.bf16.mxu0 0
        %859 = vmatpush1.bf16.msra.mxu0 0
        %860 = vmatprep.subr.bf16.mxu0 0
        %861 = vmatpush1.bf16.msra.mxu0 0
        %862 = vmatprep.subr.bf16.mxu0 0
        %863 = vmatpush1.bf16.msra.mxu0 0
        %864 = vmatprep.subr.bf16.mxu0 0
        %865 = vmatpush1.bf16.msra.mxu0 0
        %866 = vmatprep.subr.bf16.mxu0 0
        %867 = vmatpush1.bf16.msra.mxu0 0
        %868 = vmatprep.mubr.bf16.mxu0 0
        %869 = vmatmul.mubr.bf16.gmra.mrb[0].mxu0 %v834
        %v870 = vpop.f32.mrb[0].mxu0
        %v871 = vadd.f32 0.0, %v870
        %v872 = vpop.f32.mrb[0].mxu0
        %v873 = vadd.f32 0.0, %v872
        %v874 = vpop.f32.mrb[0].mxu0
        %v875 = vpop.f32.mrb[0].mxu0
        %876 = vdwg.mxu0
        %v877 = vmul.f32 %v871, %v580
        %v878 = vmul.f32 %v873, %v584
        %v879 = vadd.f32 %v788, %v877
        %v880 = vadd.f32 %v789, %v878
        %s881 = scalar_lea.vmem [#allocation7], 16
        %v882 = vld [vmem:[%s881] sm:$0xf]
        %883 = vrot.lane.b32.xlu0 %v510, 111
        %v884 = vpop.permute.xlu0 %883
        %885 = vrot.lane.b32.xlu0 %v499, 111
        %v886 = vpop.permute.xlu0 %885
        %887 = vrot.lane.b32.xlu0 %v522, 111
        %v888 = vpop.permute.xlu0 %887
        %889 = vrot.lane.b32.xlu0 %v513, 111
        %v890 = vpop.permute.xlu0 %889
        %891 = vrot.lane.b32.xlu0 %v500, 111
        %v892 = vpop.permute.xlu0 %891
        %893 = vrot.lane.b32.xlu0 %v524, 111
        %v894 = vpop.permute.xlu0 %893
        %895 = vrot.lane.b32.xlu0 %v516, 111
        %v896 = vpop.permute.xlu0 %895
        %897 = vrot.lane.b32.xlu0 %v501, 111
        %v898 = vpop.permute.xlu0 %897
        %899 = vrot.lane.b32.xlu0 %v526, 111
        %v900 = vpop.permute.xlu0 %899
        %901 = vrot.lane.b32.xlu0 %v519, 111
        %v902 = vpop.permute.xlu0 %901
        %903 = vrot.lane.b32.xlu0 %v502, 111
        %v904 = vpop.permute.xlu0 %903
        %905 = vrot.lane.b32.xlu0 %v528, 111
        %v906 = vpop.permute.xlu0 %905
        %vm907 = vcmask 908288
        %v908 = vsel %vm907, %v884, %v886
        %v909 = vsel %vm907, %v886, %v888
        %v910 = vsel %vm907, %v890, %v892
        %v911 = vsel %vm907, %v892, %v894
        %v912 = vsel %vm907, %v896, %v898
        %v913 = vsel %vm907, %v898, %v900
        %v914 = vsel %vm907, %v902, %v904
        %v915 = vsel %vm907, %v904, %v906
        %v925 = vsel %vm530, %v882, 0
        %927 = vmatprep.subr.bf16.mxu0 %v909
        %928 = vmatpush1.bf16.msra.mxu0 %v908
        %929 = vmatprep.subr.bf16.mxu0 %v911
        %930 = vmatpush1.bf16.msra.mxu0 %v910
        %931 = vmatprep.subr.bf16.mxu0 %v913
        %932 = vmatpush1.bf16.msra.mxu0 %v912
        %933 = vmatprep.subr.bf16.mxu0 %v915
        %934 = vmatpush1.bf16.msra.mxu0 %v914
        %935 = vmatprep.subr.bf16.mxu0 0
        %936 = vmatpush1.bf16.msra.mxu0 0
        %937 = vmatprep.subr.bf16.mxu0 0
        %938 = vmatpush1.bf16.msra.mxu0 0
        %939 = vmatprep.subr.bf16.mxu0 0
        %940 = vmatpush1.bf16.msra.mxu0 0
        %941 = vmatprep.subr.bf16.mxu0 0
        %942 = vmatpush1.bf16.msra.mxu0 0
        %943 = vmatprep.subr.bf16.mxu0 0
        %944 = vmatpush1.bf16.msra.mxu0 0
        %945 = vmatprep.subr.bf16.mxu0 0
        %946 = vmatpush1.bf16.msra.mxu0 0
        %947 = vmatprep.subr.bf16.mxu0 0
        %948 = vmatpush1.bf16.msra.mxu0 0
        %949 = vmatprep.subr.bf16.mxu0 0
        %950 = vmatpush1.bf16.msra.mxu0 0
        %951 = vmatprep.subr.bf16.mxu0 0
        %952 = vmatpush1.bf16.msra.mxu0 0
        %953 = vmatprep.subr.bf16.mxu0 0
        %954 = vmatpush1.bf16.msra.mxu0 0
        %955 = vmatprep.subr.bf16.mxu0 0
        %956 = vmatpush1.bf16.msra.mxu0 0
        %957 = vmatprep.subr.bf16.mxu0 0
        %958 = vmatpush1.bf16.msra.mxu0 0
        %959 = vmatprep.mubr.bf16.mxu0 0
        %960 = vmatmul.mubr.bf16.gmra.mrb[0].mxu0 %v925
        %v961 = vpop.f32.mrb[0].mxu0
        %v962 = vadd.f32 0.0, %v961
        %v963 = vpop.f32.mrb[0].mxu0
        %v964 = vadd.f32 0.0, %v963
        %v965 = vpop.f32.mrb[0].mxu0
        %v966 = vpop.f32.mrb[0].mxu0
        %967 = vdwg.mxu0
        %v968 = vadd.f32 %v879, %v962
        %v969 = vadd.f32 %v880, %v964
        %s970 = scalar_lea.vmem [#allocation7], 20
        %v971 = vld [vmem:[%s970] sm:$0xf]
        %972 = vrot.lane.b32.xlu0 %v510, 110
        %v973 = vpop.permute.xlu0 %972
        %974 = vrot.lane.b32.xlu0 %v499, 110
        %v975 = vpop.permute.xlu0 %974
        %976 = vrot.lane.b32.xlu0 %v522, 110
        %v977 = vpop.permute.xlu0 %976
        %978 = vrot.lane.b32.xlu0 %v513, 110
        %v979 = vpop.permute.xlu0 %978
        %980 = vrot.lane.b32.xlu0 %v500, 110
        %v981 = vpop.permute.xlu0 %980
        %982 = vrot.lane.b32.xlu0 %v524, 110
        %v983 = vpop.permute.xlu0 %982
        %984 = vrot.lane.b32.xlu0 %v516, 110
        %v985 = vpop.permute.xlu0 %984
        %986 = vrot.lane.b32.xlu0 %v501, 110
        %v987 = vpop.permute.xlu0 %986
        %988 = vrot.lane.b32.xlu0 %v526, 110
        %v989 = vpop.permute.xlu0 %988
        %990 = vrot.lane.b32.xlu0 %v519, 110
        %v991 = vpop.permute.xlu0 %990
        %992 = vrot.lane.b32.xlu0 %v502, 110
        %v993 = vpop.permute.xlu0 %992
        %994 = vrot.lane.b32.xlu0 %v528, 110
        %v995 = vpop.permute.xlu0 %994
        %vm996 = vcmask 900096
        %v997 = vsel %vm996, %v973, %v975
        %v998 = vsel %vm996, %v975, %v977
        %v999 = vsel %vm996, %v979, %v981
        %v1000 = vsel %vm996, %v981, %v983
        %v1001 = vsel %vm996, %v985, %v987
        %v1002 = vsel %vm996, %v987, %v989
        %v1003 = vsel %vm996, %v991, %v993
        %v1004 = vsel %vm996, %v993, %v995
        %v1014 = vsel %vm530, %v971, 0
        %1016 = vmatprep.subr.bf16.mxu0 %v998
        %1017 = vmatpush1.bf16.msra.mxu0 %v997
        %1018 = vmatprep.subr.bf16.mxu0 %v1000
        %1019 = vmatpush1.bf16.msra.mxu0 %v999
        %1020 = vmatprep.subr.bf16.mxu0 %v1002
        %1021 = vmatpush1.bf16.msra.mxu0 %v1001
        %1022 = vmatprep.subr.bf16.mxu0 %v1004
        %1023 = vmatpush1.bf16.msra.mxu0 %v1003
        %1024 = vmatprep.subr.bf16.mxu0 0
        %1025 = vmatpush1.bf16.msra.mxu0 0
        %1026 = vmatprep.subr.bf16.mxu0 0
        %1027 = vmatpush1.bf16.msra.mxu0 0
        %1028 = vmatprep.subr.bf16.mxu0 0
        %1029 = vmatpush1.bf16.msra.mxu0 0
        %1030 = vmatprep.subr.bf16.mxu0 0
        %1031 = vmatpush1.bf16.msra.mxu0 0
        %1032 = vmatprep.subr.bf16.mxu0 0
        %1033 = vmatpush1.bf16.msra.mxu0 0
        %1034 = vmatprep.subr.bf16.mxu0 0
        %1035 = vmatpush1.bf16.msra.mxu0 0
        %1036 = vmatprep.subr.bf16.mxu0 0
        %1037 = vmatpush1.bf16.msra.mxu0 0
        %1038 = vmatprep.subr.bf16.mxu0 0
        %1039 = vmatpush1.bf16.msra.mxu0 0
        %1040 = vmatprep.subr.bf16.mxu0 0
        %1041 = vmatpush1.bf16.msra.mxu0 0
        %1042 = vmatprep.subr.bf16.mxu0 0
        %1043 = vmatpush1.bf16.msra.mxu0 0
        %1044 = vmatprep.subr.bf16.mxu0 0
        %1045 = vmatpush1.bf16.msra.mxu0 0
        %1046 = vmatprep.subr.bf16.mxu0 0
        %1047 = vmatpush1.bf16.msra.mxu0 0
        %1048 = vmatprep.mubr.bf16.mxu0 0
        %1049 = vmatmul.mubr.bf16.gmra.mrb[0].mxu0 %v1014
        %v1050 = vpop.f32.mrb[0].mxu0
        %v1051 = vadd.f32 0.0, %v1050
        %v1052 = vpop.f32.mrb[0].mxu0
        %v1053 = vadd.f32 0.0, %v1052
        %v1054 = vpop.f32.mrb[0].mxu0
        %v1055 = vpop.f32.mrb[0].mxu0
        %1056 = vdwg.mxu0
        %v1057 = vmul.f32 %v1051, %v779
        %v1058 = vmul.f32 %v1053, %v783
        %v1059 = vadd.f32 %v968, %v1057
        %v1060 = vadd.f32 %v969, %v1058
        %s1061 = scalar_lea.vmem [#allocation7], 24
        %v1062 = vld [vmem:[%s1061] sm:$0xf]
        %1063 = vrot.lane.b32.xlu0 %v510, 96
        %v1064 = vpop.permute.xlu0 %1063
        %1065 = vrot.lane.b32.xlu0 %v499, 96
        %v1066 = vpop.permute.xlu0 %1065
        %1067 = vrot.lane.b32.xlu0 %v522, 96
        %v1068 = vpop.permute.xlu0 %1067
        %1069 = vrot.lane.b32.xlu0 %v513, 96
        %v1070 = vpop.permute.xlu0 %1069
        %1071 = vrot.lane.b32.xlu0 %v500, 96
        %v1072 = vpop.permute.xlu0 %1071
        %1073 = vrot.lane.b32.xlu0 %v524, 96
        %v1074 = vpop.permute.xlu0 %1073
        %1075 = vrot.lane.b32.xlu0 %v516, 96
        %v1076 = vpop.permute.xlu0 %1075
        %1077 = vrot.lane.b32.xlu0 %v501, 96
        %v1078 = vpop.permute.xlu0 %1077
        %1079 = vrot.lane.b32.xlu0 %v526, 96
        %v1080 = vpop.permute.xlu0 %1079
        %1081 = vrot.lane.b32.xlu0 %v519, 96
        %v1082 = vpop.permute.xlu0 %1081
        %1083 = vrot.lane.b32.xlu0 %v502, 96
        %v1084 = vpop.permute.xlu0 %1083
        %1085 = vrot.lane.b32.xlu0 %v528, 96
        %v1086 = vpop.permute.xlu0 %1085
        %vm1087 = vcmask 785408
        %v1088 = vsel %vm1087, %v1064, %v1066
        %v1089 = vsel %vm1087, %v1066, %v1068
        %v1090 = vsel %vm1087, %v1070, %v1072
        %v1091 = vsel %vm1087, %v1072, %v1074
        %v1092 = vsel %vm1087, %v1076, %v1078
        %v1093 = vsel %vm1087, %v1078, %v1080
        %v1094 = vsel %vm1087, %v1082, %v1084
        %v1095 = vsel %vm1087, %v1084, %v1086
        %v1105 = vsel %vm530, %v1062, 0
        %1107 = vmatprep.subr.bf16.mxu0 %v1089
        %1108 = vmatpush1.bf16.msra.mxu0 %v1088
        %1109 = vmatprep.subr.bf16.mxu0 %v1091
        %1110 = vmatpush1.bf16.msra.mxu0 %v1090
        %1111 = vmatprep.subr.bf16.mxu0 %v1093
        %1112 = vmatpush1.bf16.msra.mxu0 %v1092
        %1113 = vmatprep.subr.bf16.mxu0 %v1095
        %1114 = vmatpush1.bf16.msra.mxu0 %v1094
        %1115 = vmatprep.subr.bf16.mxu0 0
        %1116 = vmatpush1.bf16.msra.mxu0 0
        %1117 = vmatprep.subr.bf16.mxu0 0
        %1118 = vmatpush1.bf16.msra.mxu0 0
        %1119 = vmatprep.subr.bf16.mxu0 0
        %1120 = vmatpush1.bf16.msra.mxu0 0
        %1121 = vmatprep.subr.bf16.mxu0 0
        %1122 = vmatpush1.bf16.msra.mxu0 0
        %1123 = vmatprep.subr.bf16.mxu0 0
        %1124 = vmatpush1.bf16.msra.mxu0 0
        %1125 = vmatprep.subr.bf16.mxu0 0
        %1126 = vmatpush1.bf16.msra.mxu0 0
        %1127 = vmatprep.subr.bf16.mxu0 0
        %1128 = vmatpush1.bf16.msra.mxu0 0
        %1129 = vmatprep.subr.bf16.mxu0 0
        %1130 = vmatpush1.bf16.msra.mxu0 0
        %1131 = vmatprep.subr.bf16.mxu0 0
        %1132 = vmatpush1.bf16.msra.mxu0 0
        %1133 = vmatprep.subr.bf16.mxu0 0
        %1134 = vmatpush1.bf16.msra.mxu0 0
        %1135 = vmatprep.subr.bf16.mxu0 0
        %1136 = vmatpush1.bf16.msra.mxu0 0
        %1137 = vmatprep.subr.bf16.mxu0 0
        %1138 = vmatpush1.bf16.msra.mxu0 0
        %1139 = vmatprep.mubr.bf16.mxu0 0
        %1140 = vmatmul.mubr.bf16.gmra.mrb[0].mxu0 %v1105
        %v1141 = vpop.f32.mrb[0].mxu0
        %v1142 = vadd.f32 0.0, %v1141
        %v1143 = vpop.f32.mrb[0].mxu0
        %v1144 = vadd.f32 0.0, %v1143
        %v1145 = vpop.f32.mrb[0].mxu0
        %v1146 = vpop.f32.mrb[0].mxu0
        %1147 = vdwg.mxu0
        %v1148 = vmul.f32 %v1142, %v580
        %v1149 = vmul.f32 %v1144, %v584
        %v1150 = vadd.f32 %v1059, %v1148
        %v1151 = vadd.f32 %v1060, %v1149
        %s1152 = scalar_lea.vmem [#allocation7], 28
        %v1153 = vld [vmem:[%s1152] sm:$0xf]
        %1154 = vrot.lane.b32.xlu0 %v510, 95
        %v1155 = vpop.permute.xlu0 %1154
        %1156 = vrot.lane.b32.xlu0 %v499, 95
        %v1157 = vpop.permute.xlu0 %1156
        %1158 = vrot.lane.b32.xlu0 %v522, 95
        %v1159 = vpop.permute.xlu0 %1158
        %1160 = vrot.lane.b32.xlu0 %v513, 95
        %v1161 = vpop.permute.xlu0 %1160
        %1162 = vrot.lane.b32.xlu0 %v500, 95
        %v1163 = vpop.permute.xlu0 %1162
        %1164 = vrot.lane.b32.xlu0 %v524, 95
        %v1165 = vpop.permute.xlu0 %1164
        %1166 = vrot.lane.b32.xlu0 %v516, 95
        %v1167 = vpop.permute.xlu0 %1166
        %1168 = vrot.lane.b32.xlu0 %v501, 95
        %v1169 = vpop.permute.xlu0 %1168
        %1170 = vrot.lane.b32.xlu0 %v526, 95
        %v1171 = vpop.permute.xlu0 %1170
        %1172 = vrot.lane.b32.xlu0 %v519, 95
        %v1173 = vpop.permute.xlu0 %1172
        %1174 = vrot.lane.b32.xlu0 %v502, 95
        %v1175 = vpop.permute.xlu0 %1174
        %1176 = vrot.lane.b32.xlu0 %v528, 95
        %v1177 = vpop.permute.xlu0 %1176
        %vm1178 = vcmask 777216
        %v1179 = vsel %vm1178, %v1155, %v1157
        %v1180 = vsel %vm1178, %v1157, %v1159
        %v1181 = vsel %vm1178, %v1161, %v1163
        %v1182 = vsel %vm1178, %v1163, %v1165
        %v1183 = vsel %vm1178, %v1167, %v1169
        %v1184 = vsel %vm1178, %v1169, %v1171
        %v1185 = vsel %vm1178, %v1173, %v1175
        %v1186 = vsel %vm1178, %v1175, %v1177
        %v1196 = vsel %vm530, %v1153, 0
        %1198 = vmatprep.subr.bf16.mxu0 %v1180
        %1199 = vmatpush1.bf16.msra.mxu0 %v1179
        %1200 = vmatprep.subr.bf16.mxu0 %v1182
        %1201 = vmatpush1.bf16.msra.mxu0 %v1181
        %1202 = vmatprep.subr.bf16.mxu0 %v1184
        %1203 = vmatpush1.bf16.msra.mxu0 %v1183
        %1204 = vmatprep.subr.bf16.mxu0 %v1186
        %1205 = vmatpush1.bf16.msra.mxu0 %v1185
        %1206 = vmatprep.subr.bf16.mxu0 0
        %1207 = vmatpush1.bf16.msra.mxu0 0
        %1208 = vmatprep.subr.bf16.mxu0 0
        %1209 = vmatpush1.bf16.msra.mxu0 0
        %1210 = vmatprep.subr.bf16.mxu0 0
        %1211 = vmatpush1.bf16.msra.mxu0 0
        %1212 = vmatprep.subr.bf16.mxu0 0
        %1213 = vmatpush1.bf16.msra.mxu0 0
        %1214 = vmatprep.subr.bf16.mxu0 0
        %1215 = vmatpush1.bf16.msra.mxu0 0
        %1216 = vmatprep.subr.bf16.mxu0 0
        %1217 = vmatpush1.bf16.msra.mxu0 0
        %1218 = vmatprep.subr.bf16.mxu0 0
        %1219 = vmatpush1.bf16.msra.mxu0 0
        %1220 = vmatprep.subr.bf16.mxu0 0
        %1221 = vmatpush1.bf16.msra.mxu0 0
        %1222 = vmatprep.subr.bf16.mxu0 0
        %1223 = vmatpush1.bf16.msra.mxu0 0
        %1224 = vmatprep.subr.bf16.mxu0 0
        %1225 = vmatpush1.bf16.msra.mxu0 0
        %1226 = vmatprep.subr.bf16.mxu0 0
        %1227 = vmatpush1.bf16.msra.mxu0 0
        %1228 = vmatprep.subr.bf16.mxu0 0
        %1229 = vmatpush1.bf16.msra.mxu0 0
        %1230 = vmatprep.mubr.bf16.mxu0 0
        %1231 = vmatmul.mubr.bf16.gmra.mrb[0].mxu0 %v1196
        %v1232 = vpop.f32.mrb[0].mxu0
        %v1233 = vadd.f32 0.0, %v1232
        %v1234 = vpop.f32.mrb[0].mxu0
        %v1235 = vadd.f32 0.0, %v1234
        %v1236 = vpop.f32.mrb[0].mxu0
        %v1237 = vpop.f32.mrb[0].mxu0
        %1238 = vdwg.mxu0
        %v1239 = vadd.f32 %v1150, %v1233
        %v1240 = vadd.f32 %v1151, %v1235
        %s1241 = scalar_lea.vmem [#allocation7], 32
        %v1242 = vld [vmem:[%s1241] sm:$0xf]
        %1243 = vrot.lane.b32.xlu0 %v510, 94
        %v1244 = vpop.permute.xlu0 %1243
        %1245 = vrot.lane.b32.xlu0 %v499, 94
        %v1246 = vpop.permute.xlu0 %1245
        %1247 = vrot.lane.b32.xlu0 %v522, 94
        %v1248 = vpop.permute.xlu0 %1247
        %1249 = vrot.lane.b32.xlu0 %v513, 94
        %v1250 = vpop.permute.xlu0 %1249
        %1251 = vrot.lane.b32.xlu0 %v500, 94
        %v1252 = vpop.permute.xlu0 %1251
        %1253 = vrot.lane.b32.xlu0 %v524, 94
        %v1254 = vpop.permute.xlu0 %1253
        %1255 = vrot.lane.b32.xlu0 %v516, 94
        %v1256 = vpop.permute.xlu0 %1255
        %1257 = vrot.lane.b32.xlu0 %v501, 94
        %v1258 = vpop.permute.xlu0 %1257
        %1259 = vrot.lane.b32.xlu0 %v526, 94
        %v1260 = vpop.permute.xlu0 %1259
        %1261 = vrot.lane.b32.xlu0 %v519, 94
        %v1262 = vpop.permute.xlu0 %1261
        %1263 = vrot.lane.b32.xlu0 %v502, 94
        %v1264 = vpop.permute.xlu0 %1263
        %1265 = vrot.lane.b32.xlu0 %v528, 94
        %v1266 = vpop.permute.xlu0 %1265
        %vm1267 = vcmask 769024
        %v1268 = vsel %vm1267, %v1244, %v1246
        %v1269 = vsel %vm1267, %v1246, %v1248
        %v1270 = vsel %vm1267, %v1250, %v1252
        %v1271 = vsel %vm1267, %v1252, %v1254
        %v1272 = vsel %vm1267, %v1256, %v1258
        %v1273 = vsel %vm1267, %v1258, %v1260
        %v1274 = vsel %vm1267, %v1262, %v1264
        %v1275 = vsel %vm1267, %v1264, %v1266
        %v1285 = vsel %vm530, %v1242, 0
        %1287 = vmatprep.subr.bf16.mxu0 %v1269
        %1288 = vmatpush1.bf16.msra.mxu0 %v1268
        %1289 = vmatprep.subr.bf16.mxu0 %v1271
        %1290 = vmatpush1.bf16.msra.mxu0 %v1270
        %1291 = vmatprep.subr.bf16.mxu0 %v1273
        %1292 = vmatpush1.bf16.msra.mxu0 %v1272
        %1293 = vmatprep.subr.bf16.mxu0 %v1275
        %1294 = vmatpush1.bf16.msra.mxu0 %v1274
        %1295 = vmatprep.subr.bf16.mxu0 0
        %1296 = vmatpush1.bf16.msra.mxu0 0
        %1297 = vmatprep.subr.bf16.mxu0 0
        %1298 = vmatpush1.bf16.msra.mxu0 0
        %1299 = vmatprep.subr.bf16.mxu0 0
        %1300 = vmatpush1.bf16.msra.mxu0 0
        %1301 = vmatprep.subr.bf16.mxu0 0
        %1302 = vmatpush1.bf16.msra.mxu0 0
        %1303 = vmatprep.subr.bf16.mxu0 0
        %1304 = vmatpush1.bf16.msra.mxu0 0
        %1305 = vmatprep.subr.bf16.mxu0 0
        %1306 = vmatpush1.bf16.msra.mxu0 0
        %1307 = vmatprep.subr.bf16.mxu0 0
        %1308 = vmatpush1.bf16.msra.mxu0 0
        %1309 = vmatprep.subr.bf16.mxu0 0
        %1310 = vmatpush1.bf16.msra.mxu0 0
        %1311 = vmatprep.subr.bf16.mxu0 0
        %1312 = vmatpush1.bf16.msra.mxu0 0
        %1313 = vmatprep.subr.bf16.mxu0 0
        %1314 = vmatpush1.bf16.msra.mxu0 0
        %1315 = vmatprep.subr.bf16.mxu0 0
        %1316 = vmatpush1.bf16.msra.mxu0 0
        %1317 = vmatprep.subr.bf16.mxu0 0
        %1318 = vmatpush1.bf16.msra.mxu0 0
        %1319 = vmatprep.mubr.bf16.mxu0 0
        %1320 = vmatmul.mubr.bf16.gmra.mrb[0].mxu0 %v1285
        %v1321 = vpop.f32.mrb[0].mxu0
        %v1322 = vadd.f32 0.0, %v1321
        %v1323 = vpop.f32.mrb[0].mxu0
        %v1324 = vadd.f32 0.0, %v1323
        %v1325 = vpop.f32.mrb[0].mxu0
        %v1326 = vpop.f32.mrb[0].mxu0
        %1327 = vdwg.mxu0
        %v1328 = vmul.f32 %v1322, %v779
        %v1329 = vmul.f32 %v1324, %v783
        %v1330 = vadd.f32 %v1239, %v1328
        %v1331 = vadd.f32 %v1240, %v1329
        %v1332 = vld [vmem:[#allocation8] sm:$0xff]
        %1334 = vset.pattern.permute.xlu0 0
        %1335 = vperm.xlu0 %1334, %v1332
        %v1336 = vpop.permute.xlu0 %1335
        %v1338 = vmul.f32 %v1330, %v1336
        %v1339 = vmul.f32 %v1331, %v1336
        %v1340 = vld [vmem:[#allocation10] sm:$0xff]
        %1342 = vset.pattern.permute.xlu0 0
        %1343 = vperm.xlu0 %1342, %v1340
        %v1344 = vpop.permute.xlu0 %1343
        %v1346 = vadd.f32 %v1338, %v1344
        %v1347 = vadd.f32 %v1339, %v1344
        %v1348 = vmax.f32 %v1346, 0.0
        %v1349 = vmax.f32 %v1347, 0.0
        %v1350 = vld [vmem:[#allocation11] sm:$0xff]
        %v1351 = vld [vmem:[#allocation13] sm:$0xff]
        %1353 = vset.pattern.permute.xlu0 0
        %1354 = vperm.xlu0 %1353, %v1351
        %v1355 = vpop.permute.xlu0 %1354
        %vm1357 = vcmask 64512
        %v1359 = vsel %vm1357, %v1350, 0
        %1361 = vmatprep.subr.mxu0 %v1349
        %1362 = vmatpush1.msra.mxu0 %v1348
        %1363 = vmatprep.subr.mxu0 0.0
        %1364 = vmatpush1.msra.mxu0 0.0
        %1365 = vmatprep.subr.mxu0 0.0
        %1366 = vmatpush1.msra.mxu0 0.0
        %1367 = vmatprep.subr.mxu0 0.0
        %1368 = vmatpush1.msra.mxu0 0.0
        %1369 = vmatprep.subr.mxu0 0.0
        %1370 = vmatpush1.msra.mxu0 0.0
        %1371 = vmatprep.subr.mxu0 0.0
        %1372 = vmatpush1.msra.mxu0 0.0
        %1373 = vmatprep.subr.mxu0 0.0
        %1374 = vmatpush1.msra.mxu0 0.0
        %1375 = vmatprep.subr.mxu0 0.0
        %1376 = vmatpush1.msra.mxu0 0.0
        %1377 = vmatprep.subr.mxu0 0.0
        %1378 = vmatpush1.msra.mxu0 0.0
        %1379 = vmatprep.subr.mxu0 0.0
        %1380 = vmatpush1.msra.mxu0 0.0
        %1381 = vmatprep.subr.mxu0 0.0
        %1382 = vmatpush1.msra.mxu0 0.0
        %1383 = vmatprep.subr.mxu0 0.0
        %1384 = vmatpush1.msra.mxu0 0.0
        %1385 = vmatprep.subr.mxu0 0.0
        %1386 = vmatpush1.msra.mxu0 0.0
        %1387 = vmatprep.subr.mxu0 0.0
        %1388 = vmatpush1.msra.mxu0 0.0
        %1389 = vmatprep.subr.mxu0 0.0
        %1390 = vmatpush1.msra.mxu0 0.0
        %1391 = vmatprep.subr.mxu0 0.0
        %1392 = vmatpush1.msra.mxu0 0.0
        %1393 = vmatprep.subr.mxu0 0.0
        %1394 = vmatpush1.msra.mxu0 0.0
        %1395 = vmatprep.subr.mxu0 0.0
        %1396 = vmatpush1.msra.mxu0 0.0
        %1397 = vmatprep.subr.mxu0 0.0
        %1398 = vmatpush1.msra.mxu0 0.0
        %1399 = vmatprep.subr.mxu0 0.0
        %1400 = vmatpush1.msra.mxu0 0.0
        %1401 = vmatprep.subr.mxu0 0.0
        %1402 = vmatpush1.msra.mxu0 0.0
        %1403 = vmatprep.subr.mxu0 0.0
        %1404 = vmatpush1.msra.mxu0 0.0
        %1405 = vmatprep.subr.mxu0 0.0
        %1406 = vmatpush1.msra.mxu0 0.0
        %1407 = vmatprep.subr.mxu0 0.0
        %1408 = vmatpush1.msra.mxu0 0.0
        %1409 = vmatprep.subr.mxu0 0.0
        %1410 = vmatpush1.msra.mxu0 0.0
        %1411 = vmatprep.subr.mxu0 0.0
        %1412 = vmatpush1.msra.mxu0 0.0
        %1413 = vmatprep.subr.mxu0 0.0
        %1414 = vmatpush1.msra.mxu0 0.0
        %1415 = vmatprep.subr.mxu0 0.0
        %1416 = vmatpush1.msra.mxu0 0.0
        %1417 = vmatprep.subr.mxu0 0.0
        %1418 = vmatpush1.msra.mxu0 0.0
        %1419 = vmatprep.subr.mxu0 0.0
        %1420 = vmatpush1.msra.mxu0 0.0
        %1421 = vmatprep.subr.mxu0 0.0
        %1422 = vmatpush1.msra.mxu0 0.0
        %1423 = vmatprep.subr.mxu0 0.0
        %1424 = vmatpush1.msra.mxu0 0.0
        %1425 = vmatprep.mubr.f32.mxu0 0.0
        %1426 = vmatmul.mubr.f32.gmra.mrb[0].mxu0 %v1359
        %v1427 = vpop.f32.mrb[0].mxu0
        %v1428 = vadd.f32 %v1355, %v1427
        %v1429 = vpop.f32.mrb[0].mxu0
        %v1430 = vadd.f32 %v1355, %v1429
        %1431 = vdwg.mxu0
        %1432 = vst [vmem:[%s440] sm:$0xff] %v1428
        %1433 = vst [vmem:[%s440 + $0x8] sm:$0xff] %v1430
        %s1434 = sand.u32 %s217, 1
        %s1435 = scalar_lea.sflag [#allocation4], %s1434
        %s1436 = sand.u32 %s217, 1
        %s1437 = smul.addr %s1436, 16
        %s1438 = scalar_lea.vmem [#allocation16], %s1437
        // Predicated region
        $region85: #{psp2_head.3} parent=51 // pred_check
          %p1439 = pneg %p227
        $region86: #{psp2_head.3} parent=51 // pred_check_branch
          %1441 = sbr.rel (%p1439) target = $region88
        $region87: #{psp2_head.3} parent=51 // pred_region
          %s1443 = ssub.s32 256, 256
          %1444 = vsyncadd %s1435, %s1443
          %s1445 = smul.addr %s31, 2
          %s1446 = smul.addr %s1445, 128
          %s1447 = scalar_lea.hbm %s8, %s1446
          %s1449 = sshll.u32 %s1438, 4
          %s1450 = int_to_ptr.vmem [resolvable:$true] %s1449
          %1452 = dma.vmem_to_hbm [thread:$0]  %s1450, 256, %s1447, %s1435
        $region88: #{psp2_head.3} parent=51 // pred_fallthru
          _
      $region52: #{psp2_head.3} parent=5 // pred_fallthru
        _
      %p1453 = scmp.le.s32.totalorder 2, %s26
      // Predicated region
      $region89: #{psp2_head.3} parent=5 // pred_check
        %p1454 = pneg %p1453
      $region90: #{psp2_head.3} parent=5 // pred_check_branch
        %1456 = sbr.rel (%p1454) target = $region92
      $region91: #{psp2_head.3} parent=5 // pred_region
        %s1457 = ssub.s32 %s26, 2
        // Predicated region
        $region93: #{psp2_head.3} parent=91 // pred_check
          %p1458 = pneg %p233
        $region94: #{psp2_head.3} parent=91 // pred_check_branch
          %1460 = sbr.rel (%p1458) target = $region96
        $region95: #{psp2_head.3} parent=91 // pred_region
          %s1461 = sand.u32 %s218, 1
          %s1462 = scalar_lea.sflag [#allocation4], %s1461
          %s1463 = sand.u32 %s218, 1
          %s1464 = smul.addr %s1463, 16
          %s1465 = scalar_lea.vmem [#allocation16], %s1464
          %1466 = dma.done %s1462, 256
        $region96: #{psp2_head.3} parent=91 // pred_fallthru
          _
      $region92: #{psp2_head.3} parent=5 // pred_fallthru
        _
    $region6: #{psp2_head.3} parent=1 // loop_footer
      %s30 = sadd.s32 1, %s26
    $region7: #{psp2_head.3} parent=1 // loop_footer_branch
      %25 = sbr.rel target = $region3
    $region8: #{psp2_head.3} parent=1 // loop_exit
      _
    %1467 = vsyncpa [#allocation3], 1
    %s1468 = scalar_lea.sflag [#allocation3], 1
    %1469 = vsyncpa %s1468, 1
    %1470 = vsyncpa [#allocation6], 1
    %s1471 = scalar_lea.sflag [#allocation6], 1
    %1472 = vsyncpa %s1471, 1
    %1473 = vsyncpa [#allocation9], 1
    %1474 = vsyncpa [#allocation12], 1
    %1475 = vsyncpa [#allocation15], 1
    %1476 = vsyncpa [#allocation4], 1
    %s1477 = scalar_lea.sflag [#allocation4], 1
    %1478 = vsyncpa %s1477, 1

</llo_original>
